<compile_context>
chip_gen: v7x
topology: tpu7x:2x2x1
jax: 0.10.0
libtpu: 0.0.40
codegen_flags: <defaults>
</compile_context>

<pallas_src>
import math

import jax
import jax.numpy as jnp
from jax.experimental import pallas as pl
from jax.experimental.pallas import tpu as pltpu


def _rel_attention_kernel(head_dim, scale):
    D = head_dim

    def kernel(x_ref, wqkv_ref, bqkv_ref, wp_ref, bp_ref,
               rk_ref, rv_ref, mask_ref, o_ref):
        h = pl.program_id(1)

        x = x_ref[0]                                                   # (T, C) bf16

        # Fused per-head QKV projection: one (T, C) @ (C, 3D) MXU matmul.
        qkv = jnp.dot(x, wqkv_ref[0], preferred_element_type=jnp.float32)
        qkv = qkv + bqkv_ref[0]                                        # (T, 3D) f32

        q = qkv[:, 0 * D:1 * D]                                        # (T, D) f32
        k = qkv[:, 1 * D:2 * D]
        v = qkv[:, 2 * D:3 * D]
        qb = q.astype(jnp.bfloat16)
        kb = k.astype(jnp.bfloat16)
        vb = v.astype(jnp.bfloat16)

        # Content scores (MXU, bf16 in / f32 acc) + relative-position scores
        # (per-query matvec: broadcast-multiply + lane reduction on VPU/XLU).
        attn1 = jnp.dot(qb, kb.T, preferred_element_type=jnp.float32)  # (T, T)
        attn2 = jnp.sum(q[:, None, :] * rk_ref[...], axis=-1)          # (T, T)
        att = (attn1 + attn2) * scale

        # Additive mask: False -> -1e30 (no NaNs even for fully-masked rows).
        mbias = (mask_ref[0, 0].astype(jnp.float32) - 1.0) * 1e30
        att = att + mbias

        # Numerically-stable softmax; normalization folded into the output.
        att_max = jnp.max(att, axis=-1, keepdims=True)
        p = jnp.exp(att - att_max)                                     # (T, T) f32
        denom = jnp.sum(p, axis=-1, keepdims=True)                     # (T, 1)

        pb = p.astype(jnp.bfloat16)
        w1 = jnp.dot(pb, vb, preferred_element_type=jnp.float32)       # (T, D)
        w2 = jnp.sum(p[:, :, None] * rv_ref[...], axis=1)              # (T, D)
        y = (w1 + w2) * pl.reciprocal(denom, approx=True)              # (T, D) f32

        # Per-head slice of the output projection, accumulated over the head
        # grid axis directly in the resident output block.
        partial = jnp.dot(y.astype(jnp.bfloat16), wp_ref[0],
                          preferred_element_type=jnp.float32)          # (T, C)

        @pl.when(h == 0)
        def _():
            o_ref[...] = jnp.zeros_like(o_ref)

        o_ref[0] = o_ref[0] + partial

        @pl.when(h == pl.num_programs(1) - 1)
        def _():
            o_ref[0] = o_ref[0] + bp_ref[0]

    return kernel


def relative_self_attention_forward(x, src_mask, params, n_head,
                                    max_relative_position):
    """x: (B, T, C) f32, src_mask: (B, n_head, T, T) bool or None."""
    B, T, C = x.shape
    H = n_head
    D = C // n_head
    scale = 1.0 / math.sqrt(C)     # PyTorch: 1/sqrt(k.size(-1)); k has width C
    bf16, f32 = jnp.bfloat16, jnp.float32

    # ---- host-side parameter prep (pre-transpose / per-head slice, bf16 cast) ----
    def per_head_in(w):            # (C, C) torch (out, in) -> (H, C, D)
        return jnp.transpose(w.T.reshape(C, H, D), (1, 0, 2))

    wqkv = jnp.concatenate([per_head_in(params["wq"]),
                            per_head_in(params["wk"]),
                            per_head_in(params["wv"])], axis=-1).astype(bf16)     # (H, C, 3D)
    bqkv = jnp.concatenate([params["bq"].reshape(H, 1, D),
                            params["bk"].reshape(H, 1, D),
                            params["bv"].reshape(H, 1, D)], axis=-1).astype(f32)  # (H, 1, 3D)
    wp = params["wp"].T.reshape(H, D, C).astype(bf16)                             # (H, D, C)
    bp = params["bp"].reshape(1, C).astype(f32)

    # Relative-position embedding lookups (tiny gathers; done once on the host).
    r = jnp.arange(T)
    idx = jnp.clip(r[None, :] - r[:, None],
                   -max_relative_position, max_relative_position) + max_relative_position
    rel_k = params["rel_k_table"][idx].astype(bf16)                               # (T, T, D)
    rel_v = params["rel_v_table"][idx].astype(bf16)                               # (T, T, D)

    if src_mask is None:
        mask = jnp.ones((B, H, T, T), jnp.int8)
    else:
        mask = src_mask.astype(jnp.int8)

    x_bf16 = x.astype(bf16)

    single = dict(pipeline_mode=pl.Buffered(1))   # constant blocks: single-buffer

    out = pl.pallas_call(
        _rel_attention_kernel(D, scale),
        out_shape=jax.ShapeDtypeStruct((B, T, C), f32),
        grid_spec=pltpu.PrefetchScalarGridSpec(
            num_scalar_prefetch=0,
            grid=(B, H),
            in_specs=[
                pl.BlockSpec((1, T, C), lambda b, h: (b, 0, 0)),            # x
                pl.BlockSpec((1, C, 3 * D), lambda b, h: (h, 0, 0)),        # fused per-head QKV weight
                pl.BlockSpec((1, 1, 3 * D), lambda b, h: (h, 0, 0)),        # fused per-head QKV bias
                pl.BlockSpec((1, D, C), lambda b, h: (h, 0, 0)),            # per-head proj weight
                pl.BlockSpec((1, C), lambda b, h: (0, 0), **single),        # proj bias (constant)
                pl.BlockSpec((T, T, D), lambda b, h: (0, 0, 0), **single),  # relative-K embeddings
                pl.BlockSpec((T, T, D), lambda b, h: (0, 0, 0), **single),  # relative-V embeddings
                pl.BlockSpec((1, 1, T, T), lambda b, h: (b, h, 0, 0)),      # mask (int8)
            ],
            out_specs=pl.BlockSpec((1, T, C), lambda b, h: (b, 0, 0)),
        ),
        compiler_params=pltpu.CompilerParams(
            dimension_semantics=("parallel", "arbitrary")),
    )(x_bf16, wqkv, bqkv, wp, bp, rel_k, rel_v, mask)
    return out


def _reference_forward(x, src_mask, params, n_head, max_relative_position):
    """Pure-JAX f32 reference mirroring the PyTorch forward (dropout = identity)."""
    B, T, C = x.shape
    H = n_head
    D = C // H
    lin = lambda a, w, b: a @ w.T + b
    k = lin(x, params["wk"], params["bk"])
    q = lin(x, params["wq"], params["bq"])
    v = lin(x, params["wv"], params["bv"])

    r_q1 = q.reshape(B, T, H, D).transpose(0, 2, 1, 3)
    r_k1 = k.reshape(B, T, H, D).transpose(0, 2, 1, 3)
    attn1 = r_q1 @ jnp.swapaxes(r_k1, -2, -1)                          # (B,H,T,T)

    r = jnp.arange(T)
    idx = jnp.clip(r[None, :] - r[:, None],
                   -max_relative_position, max_relative_position) + max_relative_position
    r_k2 = params["rel_k_table"][idx]                                  # (T,T,D)
    r_q2 = q.transpose(1, 0, 2).reshape(T, B * H, D)
    attn2 = jnp.matmul(r_q2, jnp.swapaxes(r_k2, 1, 2))                 # (T, B*H, T)
    attn2 = attn2.transpose(1, 0, 2).reshape(B, H, T, T)

    attn = (attn1 + attn2) * (1.0 / math.sqrt(C))
    if src_mask is not None:
        attn = jnp.where(src_mask, attn, -jnp.inf)
    attn = jax.nn.softmax(attn, axis=-1)

    r_v1 = v.reshape(B, T, H, D).transpose(0, 2, 1, 3)
    weight1 = attn @ r_v1                                              # (B,H,T,D)
    r_v2 = params["rel_v_table"][idx]                                  # (T,T,D)
    weight2 = attn.transpose(2, 0, 1, 3).reshape(T, B * H, T)
    weight2 = jnp.matmul(weight2, r_v2)                                # (T, B*H, D)
    weight2 = weight2.transpose(1, 0, 2).reshape(B, H, T, D)

    y = (weight1 + weight2).transpose(0, 2, 1, 3).reshape(B, T, C)
    return lin(y, params["wp"], params["bp"])


if __name__ == "__main__":
    # Small shapes consistent with the module (embed_dim % 8 == 0).
    B, T, C = 2, 16, 128
    n_head = 8
    D = C // n_head
    max_relative_position = 8          # stands in for args.block_size + args.time_cond

    key = jax.random.PRNGKey(0)
    kx, kq, kk, kv, kp, krk, krv = jax.random.split(key, 7)

    x = jax.random.normal(kx, (B, T, C), jnp.float32)

    def init_linear(k_, out_f, in_f):
        kw, kb = jax.random.split(k_)
        bound = 1.0 / math.sqrt(in_f)
        w = jax.random.uniform(kw, (out_f, in_f), jnp.float32, -bound, bound)
        b = jax.random.uniform(kb, (out_f,), jnp.float32, -bound, bound)
        return w, b

    wq, bq = init_linear(kq, C, C)
    wk, bk = init_linear(kk, C, C)
    wv, bv = init_linear(kv, C, C)
    wp, bp = init_linear(kp, C, C)

    R = 2 * max_relative_position + 1
    xav = math.sqrt(6.0 / (R + D))     # xavier_uniform for the (R, D) tables
    rel_k_table = jax.random.uniform(krk, (R, D), jnp.float32, -xav, xav)
    rel_v_table = jax.random.uniform(krv, (R, D), jnp.float32, -xav, xav)

    params = dict(wq=wq, bq=bq, wk=wk, bk=bk, wv=wv, bv=bv, wp=wp, bp=bp,
                  rel_k_table=rel_k_table, rel_v_table=rel_v_table)

    # Boolean src_mask with attn's shape (B, n_head, T, T): causal mask.
    causal = jnp.tril(jnp.ones((T, T), jnp.bool_))
    src_mask = jnp.broadcast_to(causal, (B, n_head, T, T))

    y = relative_self_attention_forward(x, src_mask, params, n_head,
                                        max_relative_position)
    y = jax.block_until_ready(y)

    y_ref = _reference_forward(x, src_mask, params, n_head, max_relative_position)
    err = float(jnp.max(jnp.abs(y - y_ref)))
    assert err < 5e-2, f"mismatch vs reference: max abs err = {err}"

    print("KERNEL_OK")
</pallas_src>

<mosaic_0001>
module attributes {stable_mosaic.version = 11 : i64} {
  func.func @kernel(%arg0: i32, %arg1: i32, %arg2: memref<1x16x128xbf16, #tpu.memory_space<vmem>>, %arg3: memref<1x128x48xbf16, #tpu.memory_space<vmem>>, %arg4: memref<1x1x48xf32, #tpu.memory_space<vmem>>, %arg5: memref<1x16x128xbf16, #tpu.memory_space<vmem>>, %arg6: memref<1x128xf32, #tpu.memory_space<vmem>>, %arg7: memref<16x16x16xbf16, #tpu.memory_space<vmem>>, %arg8: memref<16x16x16xbf16, #tpu.memory_space<vmem>>, %arg9: memref<1x1x16x16xi8, #tpu.memory_space<vmem>>, %arg10: memref<1x16x128xf32, #tpu.memory_space<vmem>>) attributes {dimension_semantics = [#tpu.dimension_semantics<parallel>, #tpu.dimension_semantics<arbitrary>], iteration_bounds = array<i64: 2, 8>, scalar_prefetch = 0 : i64, scratch_operands = 0 : i64, tpu.core_type = #tpu.core_type<tc>, window_params = [{transform_indices = @transform_0, window_bounds = array<i64: 1, 16, 128>}, {transform_indices = @transform_1, window_bounds = array<i64: 1, 128, 48>}, {transform_indices = @transform_2, window_bounds = array<i64: 1, 1, 48>}, {transform_indices = @transform_3, window_bounds = array<i64: 1, 16, 128>}, {pipeline_mode = #tpu.pipeline_mode<synchronous>, transform_indices = @transform_4, window_bounds = array<i64: 1, 128>}, {pipeline_mode = #tpu.pipeline_mode<synchronous>, transform_indices = @transform_5, window_bounds = array<i64: 16, 16, 16>}, {pipeline_mode = #tpu.pipeline_mode<synchronous>, transform_indices = @transform_6, window_bounds = array<i64: 16, 16, 16>}, {transform_indices = @transform_7, window_bounds = array<i64: 1, 1, 16, 16>}, {transform_indices = @transform_8, window_bounds = array<i64: 1, 16, 128>}]} {
    %c0 = arith.constant 0 : index
    %c0_0 = arith.constant 0 : index
    %c0_1 = arith.constant 0 : index
    %0 = vector.load %arg2[%c0, %c0_0, %c0_1] : memref<1x16x128xbf16, #tpu.memory_space<vmem>>, vector<1x16x128xbf16>
    %1 = vector.shape_cast %0 : vector<1x16x128xbf16> to vector<16x128xbf16>
    %c0_2 = arith.constant 0 : index
    %c0_3 = arith.constant 0 : index
    %c0_4 = arith.constant 0 : index
    %2 = vector.load %arg3[%c0_2, %c0_3, %c0_4] : memref<1x128x48xbf16, #tpu.memory_space<vmem>>, vector<1x128x48xbf16>
    %3 = vector.shape_cast %2 : vector<1x128x48xbf16> to vector<128x48xbf16>
    %cst = arith.constant dense<0.000000e+00> : vector<16x48xf32>
    %4 = tpu.matmul %1, %3, %cst {dimension_numbers = #tpu.dot_dimension_numbers<[1], [0], [0], [1], [0, 0, 1, 1], [], []>} : vector<16x128xbf16>, vector<128x48xbf16>, vector<16x48xf32> -> vector<16x48xf32>
    %c0_5 = arith.constant 0 : index
    %c0_6 = arith.constant 0 : index
    %c0_7 = arith.constant 0 : index
    %5 = vector.load %arg4[%c0_5, %c0_6, %c0_7] : memref<1x1x48xf32, #tpu.memory_space<vmem>>, vector<1x1x48xf32>
    %6 = vector.shape_cast %5 : vector<1x1x48xf32> to vector<1x48xf32>
    %7 = vector.broadcast %6 : vector<1x48xf32> to vector<16x48xf32>
    %8 = arith.addf %4, %7 : vector<16x48xf32>
    %9 = vector.extract_strided_slice %8 {offsets = [0, 0], sizes = [16, 16], strides = [1, 1]} : vector<16x48xf32> to vector<16x16xf32>
    %10 = vector.extract_strided_slice %8 {offsets = [0, 16], sizes = [16, 16], strides = [1, 1]} : vector<16x48xf32> to vector<16x16xf32>
    %11 = vector.extract_strided_slice %8 {offsets = [0, 32], sizes = [16, 16], strides = [1, 1]} : vector<16x48xf32> to vector<16x16xf32>
    %12 = arith.truncf %9 : vector<16x16xf32> to vector<16x16xbf16>
    %13 = arith.truncf %10 : vector<16x16xf32> to vector<16x16xbf16>
    %14 = arith.truncf %11 : vector<16x16xf32> to vector<16x16xbf16>
    %15 = tpu.transpose %13, [1, 0] : vector<16x16xbf16> -> vector<16x16xbf16>
    %cst_8 = arith.constant dense<0.000000e+00> : vector<16x16xf32>
    %16 = tpu.matmul %12, %15, %cst_8 {dimension_numbers = #tpu.dot_dimension_numbers<[1], [0], [0], [1], [0, 0, 1, 1], [], []>} : vector<16x16xbf16>, vector<16x16xbf16>, vector<16x16xf32> -> vector<16x16xf32>
    %17 = vector.shape_cast %9 : vector<16x16xf32> to vector<16x1x16xf32>
    %c0_9 = arith.constant 0 : index
    %c0_10 = arith.constant 0 : index
    %c0_11 = arith.constant 0 : index
    %18 = vector.load %arg7[%c0_9, %c0_10, %c0_11] : memref<16x16x16xbf16, #tpu.memory_space<vmem>>, vector<16x16x16xbf16>
    %19 = arith.extf %18 : vector<16x16x16xbf16> to vector<16x16x16xf32>
    %20 = vector.broadcast %17 : vector<16x1x16xf32> to vector<16x16x16xf32>
    %21 = arith.mulf %20, %19 : vector<16x16x16xf32>
    %cst_12 = arith.constant dense<0.000000e+00> : vector<16x16xf32>
    %22 = vector.multi_reduction <add>, %21, %cst_12 [2] : vector<16x16x16xf32> to vector<16x16xf32>
    %23 = arith.addf %16, %22 : vector<16x16xf32>
    %cst_13 = arith.constant 0.0883883461 : f32
    %24 = vector.broadcast %cst_13 : f32 to vector<16x16xf32>
    %25 = arith.mulf %23, %24 : vector<16x16xf32>
    %c0_14 = arith.constant 0 : index
    %c0_15 = arith.constant 0 : index
    %c0_16 = arith.constant 0 : index
    %c0_17 = arith.constant 0 : index
    %26 = vector.load %arg9[%c0_14, %c0_15, %c0_16, %c0_17] : memref<1x1x16x16xi8, #tpu.memory_space<vmem>>, vector<1x1x16x16xi8>
    %27 = vector.shape_cast %26 : vector<1x1x16x16xi8> to vector<16x16xi8>
    %28 = arith.sitofp %27 : vector<16x16xi8> to vector<16x16xf32>
    %cst_18 = arith.constant 1.000000e+00 : f32
    %29 = vector.broadcast %cst_18 : f32 to vector<16x16xf32>
    %30 = arith.subf %28, %29 : vector<16x16xf32>
    %cst_19 = arith.constant 1.000000e+30 : f32
    %31 = vector.broadcast %cst_19 : f32 to vector<16x16xf32>
    %32 = arith.mulf %30, %31 : vector<16x16xf32>
    %33 = arith.addf %25, %32 : vector<16x16xf32>
    %cst_20 = arith.constant dense<0xFF800000> : vector<16xf32>
    %34 = vector.multi_reduction <maximumf>, %33, %cst_20 [1] : vector<16x16xf32> to vector<16xf32>
    %35 = vector.shape_cast %34 : vector<16xf32> to vector<16x1xf32>
    %36 = vector.broadcast %35 : vector<16x1xf32> to vector<16x16xf32>
    %37 = arith.subf %33, %36 : vector<16x16xf32>
    %38 = math.exp %37 : vector<16x16xf32>
    %cst_21 = arith.constant dense<0.000000e+00> : vector<16xf32>
    %39 = vector.multi_reduction <add>, %38, %cst_21 [1] : vector<16x16xf32> to vector<16xf32>
    %40 = vector.shape_cast %39 : vector<16xf32> to vector<16x1xf32>
    %41 = arith.truncf %38 : vector<16x16xf32> to vector<16x16xbf16>
    %cst_22 = arith.constant dense<0.000000e+00> : vector<16x16xf32>
    %42 = tpu.matmul %41, %14, %cst_22 {dimension_numbers = #tpu.dot_dimension_numbers<[1], [0], [0], [1], [0, 0, 1, 1], [], []>} : vector<16x16xbf16>, vector<16x16xbf16>, vector<16x16xf32> -> vector<16x16xf32>
    %43 = vector.shape_cast %38 : vector<16x16xf32> to vector<16x16x1xf32>
    %c0_23 = arith.constant 0 : index
    %c0_24 = arith.constant 0 : index
    %c0_25 = arith.constant 0 : index
    %44 = vector.load %arg8[%c0_23, %c0_24, %c0_25] : memref<16x16x16xbf16, #tpu.memory_space<vmem>>, vector<16x16x16xbf16>
    %45 = arith.extf %44 : vector<16x16x16xbf16> to vector<16x16x16xf32>
    %46 = vector.broadcast %43 : vector<16x16x1xf32> to vector<16x16x16xf32>
    %47 = arith.mulf %46, %45 : vector<16x16x16xf32>
    %cst_26 = arith.constant dense<0.000000e+00> : vector<16x16xf32>
    %48 = vector.multi_reduction <add>, %47, %cst_26 [1] : vector<16x16x16xf32> to vector<16x16xf32>
    %49 = arith.addf %42, %48 : vector<16x16xf32>
    %50 = tpu.reciprocal %40 {approx = true} : vector<16x1xf32> -> vector<16x1xf32>
    %51 = vector.broadcast %50 : vector<16x1xf32> to vector<16x16xf32>
    %52 = arith.mulf %49, %51 : vector<16x16xf32>
    %53 = arith.truncf %52 : vector<16x16xf32> to vector<16x16xbf16>
    %c0_27 = arith.constant 0 : index
    %c0_28 = arith.constant 0 : index
    %c0_29 = arith.constant 0 : index
    %54 = vector.load %arg5[%c0_27, %c0_28, %c0_29] : memref<1x16x128xbf16, #tpu.memory_space<vmem>>, vector<1x16x128xbf16>
    %55 = vector.shape_cast %54 : vector<1x16x128xbf16> to vector<16x128xbf16>
    %cst_30 = arith.constant dense<0.000000e+00> : vector<16x128xf32>
    %56 = tpu.matmul %53, %55, %cst_30 {dimension_numbers = #tpu.dot_dimension_numbers<[1], [0], [0], [1], [0, 0, 1, 1], [], []>} : vector<16x16xbf16>, vector<16x128xbf16>, vector<16x128xf32> -> vector<16x128xf32>
    %c0_i32 = arith.constant 0 : i32
    %57 = arith.cmpi eq, %arg1, %c0_i32 : i32
    %58 = arith.extui %57 : i1 to i32
    %c0_i32_31 = arith.constant 0 : i32
    %59 = arith.cmpi ne, %58, %c0_i32_31 : i32
    scf.if %59 {
      %cst_39 = arith.constant 0.000000e+00 : f32
      %69 = vector.broadcast %cst_39 : f32 to vector<1x16x128xf32>
      %c0_40 = arith.constant 0 : index
      %c0_41 = arith.constant 0 : index
      %c0_42 = arith.constant 0 : index
      %70 = vector.load %arg10[%c0_40, %c0_41, %c0_42] : memref<1x16x128xf32, #tpu.memory_space<vmem>>, vector<1x16x128xf32>
      tpu.vector_store %arg10[%c0_40, %c0_41, %c0_42], %69 {strides = array<i32>} : memref<1x16x128xf32, #tpu.memory_space<vmem>>, vector<1x16x128xf32>,
    } else {
    }
    %c0_32 = arith.constant 0 : index
    %c0_33 = arith.constant 0 : index
    %c0_34 = arith.constant 0 : index
    %60 = vector.load %arg10[%c0_32, %c0_33, %c0_34] : memref<1x16x128xf32, #tpu.memory_space<vmem>>, vector<1x16x128xf32>
    %61 = vector.shape_cast %60 : vector<1x16x128xf32> to vector<16x128xf32>
    %62 = arith.addf %61, %56 : vector<16x128xf32>
    %c0_35 = arith.constant 0 : index
    %c0_36 = arith.constant 0 : index
    %c0_37 = arith.constant 0 : index
    %63 = vector.load %arg10[%c0_35, %c0_36, %c0_37] : memref<1x16x128xf32, #tpu.memory_space<vmem>>, vector<1x16x128xf32>
    %64 = vector.shape_cast %63 : vector<1x16x128xf32> to vector<16x128xf32>
    %65 = vector.shape_cast %62 : vector<16x128xf32> to vector<1x16x128xf32>
    tpu.vector_store %arg10[%c0_35, %c0_36, %c0_37], %65 {strides = array<i32>} : memref<1x16x128xf32, #tpu.memory_space<vmem>>, vector<1x16x128xf32>,
    %c7_i32 = arith.constant 7 : i32
    %66 = arith.cmpi eq, %arg1, %c7_i32 : i32
    %67 = arith.extui %66 : i1 to i32
    %c0_i32_38 = arith.constant 0 : i32
    %68 = arith.cmpi ne, %67, %c0_i32_38 : i32
    scf.if %68 {
      %c0_39 = arith.constant 0 : index
      %c0_40 = arith.constant 0 : index
      %c0_41 = arith.constant 0 : index
      %69 = vector.load %arg10[%c0_39, %c0_40, %c0_41] : memref<1x16x128xf32, #tpu.memory_space<vmem>>, vector<1x16x128xf32>
      %70 = vector.shape_cast %69 : vector<1x16x128xf32> to vector<16x128xf32>
      %c0_42 = arith.constant 0 : index
      %c0_43 = arith.constant 0 : index
      %71 = vector.load %arg6[%c0_42, %c0_43] : memref<1x128xf32, #tpu.memory_space<vmem>>, vector<1x128xf32>
      %72 = vector.shape_cast %71 : vector<1x128xf32> to vector<128xf32>
      %73 = vector.shape_cast %72 : vector<128xf32> to vector<1x128xf32>
      %74 = vector.broadcast %73 : vector<1x128xf32> to vector<16x128xf32>
      %75 = arith.addf %70, %74 : vector<16x128xf32>
      %c0_44 = arith.constant 0 : index
      %c0_45 = arith.constant 0 : index
      %c0_46 = arith.constant 0 : index
      %76 = vector.load %arg10[%c0_44, %c0_45, %c0_46] : memref<1x16x128xf32, #tpu.memory_space<vmem>>, vector<1x16x128xf32>
      %77 = vector.shape_cast %76 : vector<1x16x128xf32> to vector<16x128xf32>
      %78 = vector.shape_cast %75 : vector<16x128xf32> to vector<1x16x128xf32>
      tpu.vector_store %arg10[%c0_44, %c0_45, %c0_46], %78 {strides = array<i32>} : memref<1x16x128xf32, #tpu.memory_space<vmem>>, vector<1x16x128xf32>,
    } else {
    }
    return
  }
  func.func @transform_0(%arg0: i32, %arg1: i32) -> (i32, i32, i32) {
    %c0_i32 = arith.constant 0 : i32
    %c0_i32_0 = arith.constant 0 : i32
    %c0_i32_1 = arith.constant 0 : i32
    return %arg0, %c0_i32, %c0_i32_0 : i32, i32, i32
  }
  func.func @transform_1(%arg0: i32, %arg1: i32) -> (i32, i32, i32) {
    %c0_i32 = arith.constant 0 : i32
    %c0_i32_0 = arith.constant 0 : i32
    %c0_i32_1 = arith.constant 0 : i32
    return %arg1, %c0_i32, %c0_i32_0 : i32, i32, i32
  }
  func.func @transform_2(%arg0: i32, %arg1: i32) -> (i32, i32, i32) {
    %c0_i32 = arith.constant 0 : i32
    %c0_i32_0 = arith.constant 0 : i32
    %c0_i32_1 = arith.constant 0 : i32
    return %arg1, %c0_i32, %c0_i32_0 : i32, i32, i32
  }
  func.func @transform_3(%arg0: i32, %arg1: i32) -> (i32, i32, i32) {
    %c0_i32 = arith.constant 0 : i32
    %c0_i32_0 = arith.constant 0 : i32
    %c0_i32_1 = arith.constant 0 : i32
    return %arg1, %c0_i32, %c0_i32_0 : i32, i32, i32
  }
  func.func @transform_4(%arg0: i32, %arg1: i32) -> (i32, i32) {
    %c0_i32 = arith.constant 0 : i32
    %c0_i32_0 = arith.constant 0 : i32
    %c0_i32_1 = arith.constant 0 : i32
    return %c0_i32, %c0_i32_0 : i32, i32
  }
  func.func @transform_5(%arg0: i32, %arg1: i32) -> (i32, i32, i32) {
    %c0_i32 = arith.constant 0 : i32
    %c0_i32_0 = arith.constant 0 : i32
    %c0_i32_1 = arith.constant 0 : i32
    %c0_i32_2 = arith.constant 0 : i32
    return %c0_i32, %c0_i32_0, %c0_i32_1 : i32, i32, i32
  }
  func.func @transform_6(%arg0: i32, %arg1: i32) -> (i32, i32, i32) {
    %c0_i32 = arith.constant 0 : i32
    %c0_i32_0 = arith.constant 0 : i32
    %c0_i32_1 = arith.constant 0 : i32
    %c0_i32_2 = arith.constant 0 : i32
    return %c0_i32, %c0_i32_0, %c0_i32_1 : i32, i32, i32
  }
  func.func @transform_7(%arg0: i32, %arg1: i32) -> (i32, i32, i32, i32) {
    %c0_i32 = arith.constant 0 : i32
    %c0_i32_0 = arith.constant 0 : i32
    %c0_i32_1 = arith.constant 0 : i32
    return %arg0, %arg1, %c0_i32, %c0_i32_0 : i32, i32, i32, i32
  }
  func.func @transform_8(%arg0: i32, %arg1: i32) -> (i32, i32, i32) {
    %c0_i32 = arith.constant 0 : i32
    %c0_i32_0 = arith.constant 0 : i32
    %c0_i32_1 = arith.constant 0 : i32
    return %arg0, %c0_i32, %c0_i32_0 : i32, i32, i32
  }
}

</mosaic_0001>

<llo_original>
// kernel: tpu_custom_call.1
$region0: #{tpu_custom_call.1}
  #allocation0 [shape = 'u32[]', space=smem, size = 0x4, offset = 0x4, fixed_abs, tag = 'smem constant byte address 0x4 - core index']
  #allocation1 [shape = 'u32[144,128]{1,0:T(1,128)}', space=vmem, size = 0x12000, scoped, tag = 'internal scratch']
  %s0 = inlined_call_operand.vmem [shape: bf16[2,16,128], index: 0, kind: input, shape index: {}]
  %s1 = inlined_call_operand.vmem [shape: bf16[8,128,48], index: 1, kind: input, shape index: {}]
  %s2 = inlined_call_operand.vmem [shape: f32[8,1,48], index: 2, kind: input, shape index: {}]
  %s3 = inlined_call_operand.vmem [shape: bf16[8,16,128], index: 3, kind: input, shape index: {}]
  %s4 = inlined_call_operand.vmem [shape: f32[1,128], index: 4, kind: input, shape index: {}]
  %s5 = inlined_call_operand.vmem [shape: bf16[16,16,16], index: 5, kind: input, shape index: {}]
  %s6 = inlined_call_operand.vmem [shape: bf16[16,16,16], index: 6, kind: input, shape index: {}]
  %s7 = inlined_call_operand.vmem [shape: s8[2,8,16,16], index: 7, kind: input, shape index: {}]
  %s8 = inlined_call_operand.hbm [shape: f32[2,16,128], index: 8, kind: output, shape index: {}]
  %s9 = sld [smem:[#allocation0]]
  $region73: #{tpu_custom_call.1} parent=0
    _
  %s11 = ssub.s32 1, %s9
  %s12 = scalar_select 0, %s11, %s9
  $region1: #{tpu_custom_call.1} parent=0
    #allocation2 [shape = 'u8[16384]{0}', space=vmem, size = 0x4000, scoped, tag = 'output window, operand 0']
    #allocation3 [shape = 's32[2]{0}', space=sflag, size = 0x8, scoped, tag = 'scoped memory for tpu_custom_call.1']
    %13 = vsyncpa [#allocation3], 0
    %s14 = scalar_lea.sflag [#allocation3], 1
    %15 = vsyncpa %s14, 0
    loop: start=0, step=1, limit=18
    $region2: #{tpu_custom_call.1} parent=1 // loop_pre_header
      _
    $region3: #{tpu_custom_call.1} parent=1 // loop_header
      %s17 = sphi 0, %s21
      %p18 = scmp.ge.s32.totalorder %s17, 18
      %s24 = sphi 0, %s36
      %s25 = sphi 0, %s32
      %s26 = sphi 0, %s24
      %s27 = sphi 0, %s25
      %s28 = sphi 0, %s26
      %s29 = sphi 0, %s27
      %s39 = sphi 0, %s41
      %s42 = sphi 0, %s39
      %s43 = sphi 0, %s42
      %s59 = sphi 0, %s43
      %s65 = sphi 0, %s67
      %s68 = sphi 0, %s65
      %s69 = sphi 0, %s68
      %s85 = sphi 0, %s69
      %s91 = sphi 0, %s93
      %s94 = sphi 0, %s91
      %s95 = sphi 0, %s94
      %s111 = sphi 0, %s95
      %s117 = sphi 0, %s119
      %s120 = sphi 0, %s117
      %s121 = sphi 0, %s120
      %s137 = sphi 0, %s121
      %s141 = sphi 0, %s141
      %s143 = sphi 0, %s141
      %s144 = sphi 0, %s143
      %s158 = sphi 0, %s144
      %s162 = sphi 0, %s162
      %s164 = sphi 0, %s162
      %s165 = sphi 0, %s164
      %s179 = sphi 0, %s165
      %s183 = sphi 0, %s183
      %s185 = sphi 0, %s183
      %s186 = sphi 0, %s185
      %s200 = sphi 0, %s186
      %s208 = sphi 0, %s210
      %s211 = sphi 0, %s208
      %s212 = sphi 0, %s211
      %s228 = sphi 0, %s212
      %s234 = sphi 0, %s236
      %s237 = sphi 0, %s234
      %s238 = sphi 0, %s237
      %s254 = sphi 0, %s238
    $region4: #{tpu_custom_call.1} parent=1 // loop_header_branch
      %20 = sbr.rel (%p18) target = $region8
    $region5: #{tpu_custom_call.1} parent=1 // loop_body
      %s22 = ssub.s32 %s17, 1
      %s23 = ssub.s32 %s17, 2
      %s30 = sadd.s32 1, %s25
      %p31 = scmp.ge.s32.totalorder %s30, 8
      %s32 = scalar_select %p31, 0, %s30
      %s33 = sadd.s32 1, %s24
      %s34 = scalar_select %p31, %s33, %s24
      %p35 = scmp.ge.s32.totalorder %s34, 2
      %s36 = scalar_select %p35, 0, %s34
      %s37 = ssub.s32 %s24, %s36
      %p38 = scmp.eq.s32.totalorder %s37, 0
      %s40 = sadd.s32 %s39, 1
      %s41 = scalar_select %p38, %s39, %s40
      %p44 = pneg %p38
      %p45 = scmp.eq.s32.totalorder %s17, 15
      %p46 = por %p44, %p45
      %p47 = scmp.ne.s32.totalorder %s39, %s42
      %p48 = scmp.eq.s32.totalorder %s17, 0
      %p49 = por %p47, %p48
      %p50 = scmp.ne.s32.totalorder %s39, %s42
      %p51 = scmp.eq.s32.totalorder %s22, 15
      %p52 = por %p50, %p51
      %p53 = scmp.ne.s32.totalorder %s42, %s43
      %p54 = scmp.eq.s32.totalorder %s22, 0
      %p55 = por %p53, %p54
      %p56 = scmp.ne.s32.totalorder %s42, %s43
      %p57 = scmp.eq.s32.totalorder %s23, 15
      %p58 = por %p56, %p57
      %p60 = scmp.ne.s32.totalorder %s43, %s59
      %p61 = scmp.eq.s32.totalorder %s23, 0
      %p62 = por %p60, %p61
      %s63 = ssub.s32 %s25, %s32
      %p64 = scmp.eq.s32.totalorder %s63, 0
      %s66 = sadd.s32 %s65, 1
      %s67 = scalar_select %p64, %s65, %s66
      %p70 = pneg %p64
      %p71 = scmp.eq.s32.totalorder %s17, 15
      %p72 = por %p70, %p71
      %p73 = scmp.ne.s32.totalorder %s65, %s68
      %p74 = scmp.eq.s32.totalorder %s17, 0
      %p75 = por %p73, %p74
      %p76 = scmp.ne.s32.totalorder %s65, %s68
      %p77 = scmp.eq.s32.totalorder %s22, 15
      %p78 = por %p76, %p77
      %p79 = scmp.ne.s32.totalorder %s68, %s69
      %p80 = scmp.eq.s32.totalorder %s22, 0
      %p81 = por %p79, %p80
      %p82 = scmp.ne.s32.totalorder %s68, %s69
      %p83 = scmp.eq.s32.totalorder %s23, 15
      %p84 = por %p82, %p83
      %p86 = scmp.ne.s32.totalorder %s69, %s85
      %p87 = scmp.eq.s32.totalorder %s23, 0
      %p88 = por %p86, %p87
      %s89 = ssub.s32 %s25, %s32
      %p90 = scmp.eq.s32.totalorder %s89, 0
      %s92 = sadd.s32 %s91, 1
      %s93 = scalar_select %p90, %s91, %s92
      %p96 = pneg %p90
      %p97 = scmp.eq.s32.totalorder %s17, 15
      %p98 = por %p96, %p97
      %p99 = scmp.ne.s32.totalorder %s91, %s94
      %p100 = scmp.eq.s32.totalorder %s17, 0
      %p101 = por %p99, %p100
      %p102 = scmp.ne.s32.totalorder %s91, %s94
      %p103 = scmp.eq.s32.totalorder %s22, 15
      %p104 = por %p102, %p103
      %p105 = scmp.ne.s32.totalorder %s94, %s95
      %p106 = scmp.eq.s32.totalorder %s22, 0
      %p107 = por %p105, %p106
      %p108 = scmp.ne.s32.totalorder %s94, %s95
      %p109 = scmp.eq.s32.totalorder %s23, 15
      %p110 = por %p108, %p109
      %p112 = scmp.ne.s32.totalorder %s95, %s111
      %p113 = scmp.eq.s32.totalorder %s23, 0
      %p114 = por %p112, %p113
      %s115 = ssub.s32 %s25, %s32
      %p116 = scmp.eq.s32.totalorder %s115, 0
      %s118 = sadd.s32 %s117, 1
      %s119 = scalar_select %p116, %s117, %s118
      %p122 = pneg %p116
      %p123 = scmp.eq.s32.totalorder %s17, 15
      %p124 = por %p122, %p123
      %p125 = scmp.ne.s32.totalorder %s117, %s120
      %p126 = scmp.eq.s32.totalorder %s17, 0
      %p127 = por %p125, %p126
      %p128 = scmp.ne.s32.totalorder %s117, %s120
      %p129 = scmp.eq.s32.totalorder %s22, 15
      %p130 = por %p128, %p129
      %p131 = scmp.ne.s32.totalorder %s120, %s121
      %p132 = scmp.eq.s32.totalorder %s22, 0
      %p133 = por %p131, %p132
      %p134 = scmp.ne.s32.totalorder %s120, %s121
      %p135 = scmp.eq.s32.totalorder %s23, 15
      %p136 = por %p134, %p135
      %p138 = scmp.ne.s32.totalorder %s121, %s137
      %p139 = scmp.eq.s32.totalorder %s23, 0
      %p140 = por %p138, %p139
      %s142 = sadd.s32 %s141, 1
      %p145 = scmp.eq.s32.totalorder %s17, 15
      %p146 = scmp.ne.s32.totalorder %s141, %s143
      %p147 = scmp.eq.s32.totalorder %s17, 0
      %p148 = por %p146, %p147
      %p149 = scmp.ne.s32.totalorder %s141, %s143
      %p150 = scmp.eq.s32.totalorder %s22, 15
      %p151 = por %p149, %p150
      %p152 = scmp.ne.s32.totalorder %s143, %s144
      %p153 = scmp.eq.s32.totalorder %s22, 0
      %p154 = por %p152, %p153
      %p155 = scmp.ne.s32.totalorder %s143, %s144
      %p156 = scmp.eq.s32.totalorder %s23, 15
      %p157 = por %p155, %p156
      %p159 = scmp.ne.s32.totalorder %s144, %s158
      %p160 = scmp.eq.s32.totalorder %s23, 0
      %p161 = por %p159, %p160
      %s163 = sadd.s32 %s162, 1
      %p166 = scmp.eq.s32.totalorder %s17, 15
      %p167 = scmp.ne.s32.totalorder %s162, %s164
      %p168 = scmp.eq.s32.totalorder %s17, 0
      %p169 = por %p167, %p168
      %p170 = scmp.ne.s32.totalorder %s162, %s164
      %p171 = scmp.eq.s32.totalorder %s22, 15
      %p172 = por %p170, %p171
      %p173 = scmp.ne.s32.totalorder %s164, %s165
      %p174 = scmp.eq.s32.totalorder %s22, 0
      %p175 = por %p173, %p174
      %p176 = scmp.ne.s32.totalorder %s164, %s165
      %p177 = scmp.eq.s32.totalorder %s23, 15
      %p178 = por %p176, %p177
      %p180 = scmp.ne.s32.totalorder %s165, %s179
      %p181 = scmp.eq.s32.totalorder %s23, 0
      %p182 = por %p180, %p181
      %s184 = sadd.s32 %s183, 1
      %p187 = scmp.eq.s32.totalorder %s17, 15
      %p188 = scmp.ne.s32.totalorder %s183, %s185
      %p189 = scmp.eq.s32.totalorder %s17, 0
      %p190 = por %p188, %p189
      %p191 = scmp.ne.s32.totalorder %s183, %s185
      %p192 = scmp.eq.s32.totalorder %s22, 15
      %p193 = por %p191, %p192
      %p194 = scmp.ne.s32.totalorder %s185, %s186
      %p195 = scmp.eq.s32.totalorder %s22, 0
      %p196 = por %p194, %p195
      %p197 = scmp.ne.s32.totalorder %s185, %s186
      %p198 = scmp.eq.s32.totalorder %s23, 15
      %p199 = por %p197, %p198
      %p201 = scmp.ne.s32.totalorder %s186, %s200
      %p202 = scmp.eq.s32.totalorder %s23, 0
      %p203 = por %p201, %p202
      %s204 = ssub.s32 %s24, %s36
      %s205 = ssub.s32 %s25, %s32
      %s206 = sor.u32 %s204, %s205
      %p207 = scmp.eq.s32.totalorder %s206, 0
      %s209 = sadd.s32 %s208, 1
      %s210 = scalar_select %p207, %s208, %s209
      %p213 = pneg %p207
      %p214 = scmp.eq.s32.totalorder %s17, 15
      %p215 = por %p213, %p214
      %p216 = scmp.ne.s32.totalorder %s208, %s211
      %p217 = scmp.eq.s32.totalorder %s17, 0
      %p218 = por %p216, %p217
      %p219 = scmp.ne.s32.totalorder %s208, %s211
      %p220 = scmp.eq.s32.totalorder %s22, 15
      %p221 = por %p219, %p220
      %p222 = scmp.ne.s32.totalorder %s211, %s212
      %p223 = scmp.eq.s32.totalorder %s22, 0
      %p224 = por %p222, %p223
      %p225 = scmp.ne.s32.totalorder %s211, %s212
      %p226 = scmp.eq.s32.totalorder %s23, 15
      %p227 = por %p225, %p226
      %p229 = scmp.ne.s32.totalorder %s212, %s228
      %p230 = scmp.eq.s32.totalorder %s23, 0
      %p231 = por %p229, %p230
      %s232 = ssub.s32 %s24, %s36
      %p233 = scmp.eq.s32.totalorder %s232, 0
      %s235 = sadd.s32 %s234, 1
      %s236 = scalar_select %p233, %s234, %s235
      %p239 = pneg %p233
      %p240 = scmp.eq.s32.totalorder %s17, 15
      %p241 = por %p239, %p240
      %p242 = scmp.ne.s32.totalorder %s234, %s237
      %p243 = scmp.eq.s32.totalorder %s17, 0
      %p244 = por %p242, %p243
      %p245 = scmp.ne.s32.totalorder %s234, %s237
      %p246 = scmp.eq.s32.totalorder %s22, 15
      %p247 = por %p245, %p246
      %p248 = scmp.ne.s32.totalorder %s237, %s238
      %p249 = scmp.eq.s32.totalorder %s22, 0
      %p250 = por %p248, %p249
      %p251 = scmp.ne.s32.totalorder %s237, %s238
      %p252 = scmp.eq.s32.totalorder %s23, 15
      %p253 = por %p251, %p252
      %p255 = scmp.ne.s32.totalorder %s238, %s254
      %p256 = scmp.eq.s32.totalorder %s23, 0
      %p257 = por %p255, %p256
      %p258 = scmp.le.s32.totalorder 1, %s17
      %p259 = scmp.lt.s32.totalorder %s17, 17
      %p260 = pnand %p258, %p259
      %p261 = pneg %p260
      // Predicated region
      $region9: #{tpu_custom_call.1} parent=5 // pred_check
        _
      $region10: #{tpu_custom_call.1} parent=5 // pred_check_branch
        %263 = sbr.rel (%p260) target = $region12
      $region11: #{tpu_custom_call.1} parent=5 // pred_region
        %s264 = ssub.s32 %s17, 1
        // Predicated region
        $region13: #{tpu_custom_call.1} parent=11 // pred_check
          %p265 = pneg %p154
        $region14: #{tpu_custom_call.1} parent=11 // pred_check_branch
          %267 = sbr.rel (%p265) target = $region16
        $region15: #{tpu_custom_call.1} parent=11 // pred_region
          _
        $region16: #{tpu_custom_call.1} parent=11 // pred_fallthru
          _
        // Predicated region
        $region17: #{tpu_custom_call.1} parent=11 // pred_check
          %p268 = pneg %p175
        $region18: #{tpu_custom_call.1} parent=11 // pred_check_branch
          %270 = sbr.rel (%p268) target = $region20
        $region19: #{tpu_custom_call.1} parent=11 // pred_region
          _
        $region20: #{tpu_custom_call.1} parent=11 // pred_fallthru
          _
        // Predicated region
        $region21: #{tpu_custom_call.1} parent=11 // pred_check
          %p271 = pneg %p196
        $region22: #{tpu_custom_call.1} parent=11 // pred_check_branch
          %273 = sbr.rel (%p271) target = $region24
        $region23: #{tpu_custom_call.1} parent=11 // pred_region
          _
        $region24: #{tpu_custom_call.1} parent=11 // pred_fallthru
          _
      $region12: #{tpu_custom_call.1} parent=5 // pred_fallthru
        _
      %p274 = scmp.lt.s32.totalorder %s17, 16
      // Predicated region
      $region25: #{tpu_custom_call.1} parent=5 // pred_check
        %p275 = pneg %p274
      $region26: #{tpu_custom_call.1} parent=5 // pred_check_branch
        %277 = sbr.rel (%p275) target = $region28
      $region27: #{tpu_custom_call.1} parent=5 // pred_region
        // Predicated region
        $region29: #{tpu_custom_call.1} parent=27 // pred_check
          %p278 = pneg %p49
        $region30: #{tpu_custom_call.1} parent=27 // pred_check_branch
          %280 = sbr.rel (%p278) target = $region32
        $region31: #{tpu_custom_call.1} parent=27 // pred_region
          %p281 = scmp.lt.s32.totalorder %s24, 1
          %s282 = scalar_select %p281, %s24, 1
          %s283 = smul.addr %s282, 2
          %s284 = smul.addr %s283, 4
          %s285 = scalar_lea.vmem %s0, %s284
        $region32: #{tpu_custom_call.1} parent=27 // pred_fallthru
          _
        // Predicated region
        $region33: #{tpu_custom_call.1} parent=27 // pred_check
          %p286 = pneg %p75
        $region34: #{tpu_custom_call.1} parent=27 // pred_check_branch
          %288 = sbr.rel (%p286) target = $region36
        $region35: #{tpu_custom_call.1} parent=27 // pred_region
          %p289 = scmp.lt.s32.totalorder %s25, 7
          %s290 = scalar_select %p289, %s25, 7
          %s291 = smul.addr %s290, 16
          %s292 = smul.addr %s291, 4
          %s293 = scalar_lea.vmem %s1, %s292
        $region36: #{tpu_custom_call.1} parent=27 // pred_fallthru
          _
        // Predicated region
        $region37: #{tpu_custom_call.1} parent=27 // pred_check
          %p294 = pneg %p101
        $region38: #{tpu_custom_call.1} parent=27 // pred_check_branch
          %296 = sbr.rel (%p294) target = $region40
        $region39: #{tpu_custom_call.1} parent=27 // pred_region
          %p297 = scmp.lt.s32.totalorder %s25, 7
          %s298 = scalar_select %p297, %s25, 7
          %s299 = scalar_lea.vmem %s2, %s298
        $region40: #{tpu_custom_call.1} parent=27 // pred_fallthru
          _
        // Predicated region
        $region41: #{tpu_custom_call.1} parent=27 // pred_check
          %p300 = pneg %p127
        $region42: #{tpu_custom_call.1} parent=27 // pred_check_branch
          %302 = sbr.rel (%p300) target = $region44
        $region43: #{tpu_custom_call.1} parent=27 // pred_region
          %p303 = scmp.lt.s32.totalorder %s25, 7
          %s304 = scalar_select %p303, %s25, 7
          %s305 = smul.addr %s304, 2
          %s306 = smul.addr %s305, 4
          %s307 = scalar_lea.vmem %s3, %s306
        $region44: #{tpu_custom_call.1} parent=27 // pred_fallthru
          _
        // Predicated region
        $region45: #{tpu_custom_call.1} parent=27 // pred_check
          %p308 = pneg %p218
        $region46: #{tpu_custom_call.1} parent=27 // pred_check_branch
          %310 = sbr.rel (%p308) target = $region48
        $region47: #{tpu_custom_call.1} parent=27 // pred_region
          %p311 = scmp.lt.s32.totalorder %s24, 1
          %s312 = scalar_select %p311, %s24, 1
          %p313 = scmp.lt.s32.totalorder %s25, 7
          %s314 = scalar_select %p313, %s25, 7
          %s315 = smul.addr %s314, 2
          %s316 = smul.addr %s312, 16
          %s317 = sadd.s32 %s315, %s316
          %s318 = smul.addr %s317, 2
          %s319 = scalar_lea.vmem %s7, %s318
        $region48: #{tpu_custom_call.1} parent=27 // pred_fallthru
          _
      $region28: #{tpu_custom_call.1} parent=5 // pred_fallthru
        _
      %p320 = scmp.le.s32.totalorder 1, %s17
      %p321 = scmp.lt.s32.totalorder %s17, 17
      %p322 = pnand %p320, %p321
      %p323 = pneg %p322
      // Predicated region
      $region49: #{tpu_custom_call.1} parent=5 // pred_check
        _
      $region50: #{tpu_custom_call.1} parent=5 // pred_check_branch
        %325 = sbr.rel (%p322) target = $region52
      $region51: #{tpu_custom_call.1} parent=5 // pred_region
        %s326 = ssub.s32 %s17, 1
        %p327 = scmp.lt.s32.totalorder %s26, 1
        %s328 = scalar_select %p327, %s26, 1
        %s329 = smul.addr %s328, 2
        %s330 = smul.addr %s329, 4
        %s331 = scalar_lea.vmem %s0, %s330
        %p332 = pneg %p55
        %p333 = pneg %p52
        %p334 = scmp.lt.s32.totalorder %s27, 7
        %s335 = scalar_select %p334, %s27, 7
        %s336 = smul.addr %s335, 16
        %s337 = smul.addr %s336, 4
        %s338 = scalar_lea.vmem %s1, %s337
        %p339 = pneg %p81
        %p340 = pneg %p78
        %p341 = scmp.lt.s32.totalorder %s27, 7
        %s342 = scalar_select %p341, %s27, 7
        %s343 = scalar_lea.vmem %s2, %s342
        %p344 = pneg %p107
        %p345 = pneg %p104
        %p346 = scmp.lt.s32.totalorder %s27, 7
        %s347 = scalar_select %p346, %s27, 7
        %s348 = smul.addr %s347, 2
        %s349 = smul.addr %s348, 4
        %s350 = scalar_lea.vmem %s3, %s349
        %p351 = pneg %p133
        %p352 = pneg %p130
        %p353 = pneg %p154
        %p354 = pneg %p151
        %p355 = pneg %p175
        %p356 = pneg %p172
        %p357 = pneg %p196
        %p358 = pneg %p193
        %p359 = scmp.lt.s32.totalorder %s26, 1
        %s360 = scalar_select %p359, %s26, 1
        %p361 = scmp.lt.s32.totalorder %s27, 7
        %s362 = scalar_select %p361, %s27, 7
        %s363 = smul.addr %s362, 2
        %s364 = smul.addr %s360, 16
        %s365 = sadd.s32 %s363, %s364
        %s366 = smul.addr %s365, 2
        %s367 = scalar_lea.vmem %s7, %s366
        %p368 = pneg %p224
        %p369 = pneg %p221
        %p370 = pneg %p250
        %p371 = pneg %p247
        %s372 = sand.u32 %s237, 1
        %s373 = scalar_lea.sflag [#allocation3], %s372
        %s374 = sand.u32 %s237, 1
        %s375 = smul.addr %s374, 16
        %s376 = scalar_lea.vmem [#allocation2], %s375
        %p377 = scmp.lt.s32.totalorder %s26, 1
        %s378 = scalar_select %p377, %s26, 1
        %s379 = smul.addr %s378, 2
        %s380 = smul.addr %s379, 4
        %s381 = scalar_lea.vmem %s0, %s380
        %p382 = scmp.lt.s32.totalorder %s27, 7
        %s383 = scalar_select %p382, %s27, 7
        %s384 = smul.addr %s383, 16
        %s385 = smul.addr %s384, 4
        %s386 = scalar_lea.vmem %s1, %s385
        %p387 = scmp.lt.s32.totalorder %s27, 7
        %s388 = scalar_select %p387, %s27, 7
        %s389 = scalar_lea.vmem %s2, %s388
        %p390 = scmp.lt.s32.totalorder %s27, 7
        %s391 = scalar_select %p390, %s27, 7
        %s392 = smul.addr %s391, 2
        %s393 = smul.addr %s392, 4
        %s394 = scalar_lea.vmem %s3, %s393
        %p395 = scmp.lt.s32.totalorder %s26, 1
        %s396 = scalar_select %p395, %s26, 1
        %p397 = scmp.lt.s32.totalorder %s27, 7
        %s398 = scalar_select %p397, %s27, 7
        %s399 = smul.addr %s398, 2
        %s400 = smul.addr %s396, 16
        %s401 = sadd.s32 %s399, %s400
        %s402 = smul.addr %s401, 2
        %s403 = scalar_lea.vmem %s7, %s402
        %v405 = vld [vmem:[%s381] sm:$0xf]
        %v406 = vld [vmem:[%s381 + $0x4] sm:$0xf]
        %v407 = vld [vmem:[%s386] sm:$0xf]
        %v408 = vld [vmem:[%s386 + $0x4] sm:$0xf]
        %v409 = vld [vmem:[%s386 + $0x8] sm:$0xf]
        %v410 = vld [vmem:[%s386 + $0xc] sm:$0xf]
        %v411 = vld [vmem:[%s386 + $0x10] sm:$0xf]
        %v412 = vld [vmem:[%s386 + $0x14] sm:$0xf]
        %v413 = vld [vmem:[%s386 + $0x18] sm:$0xf]
        %v414 = vld [vmem:[%s386 + $0x1c] sm:$0xf]
        %v415 = vld [vmem:[%s386 + $0x20] sm:$0xf]
        %v416 = vld [vmem:[%s386 + $0x24] sm:$0xf]
        %v417 = vld [vmem:[%s386 + $0x28] sm:$0xf]
        %v418 = vld [vmem:[%s386 + $0x2c] sm:$0xf]
        %v419 = vld [vmem:[%s386 + $0x30] sm:$0xf]
        %v420 = vld [vmem:[%s386 + $0x34] sm:$0xf]
        %v421 = vld [vmem:[%s386 + $0x38] sm:$0xf]
        %v422 = vld [vmem:[%s386 + $0x3c] sm:$0xf]
        %v423 = vld [vmem:[%s389] sm:$0x1]
        %v425 = vlaneseq
        %v426 = vshrl.u32 %v425, 7
        %v427 = vsub.s32 0, %v426
        %v428 = vrot.slane %v423, %v427
        %v432 = vunpack.c.l.b16 %v405
        %v433 = vunpack.c.l.b16 %v406
        %v434 = vpack.c.b16 %v433, %v432
        %v452 = vunpack.c.l.b16 %v407
        %v453 = vunpack.c.l.b16 %v408
        %v454 = vunpack.c.l.b16 %v409
        %v455 = vunpack.c.l.b16 %v410
        %v456 = vunpack.c.l.b16 %v411
        %v457 = vunpack.c.l.b16 %v412
        %v458 = vunpack.c.l.b16 %v413
        %v459 = vunpack.c.l.b16 %v414
        %v460 = vunpack.c.l.b16 %v415
        %v461 = vunpack.c.l.b16 %v416
        %v462 = vunpack.c.l.b16 %v417
        %v463 = vunpack.c.l.b16 %v418
        %v464 = vunpack.c.l.b16 %v419
        %v465 = vunpack.c.l.b16 %v420
        %v466 = vunpack.c.l.b16 %v421
        %v467 = vunpack.c.l.b16 %v422
        %v468 = vpack.c.b16 %v453, %v452
        %v469 = vpack.c.b16 %v455, %v454
        %v470 = vpack.c.b16 %v457, %v456
        %v471 = vpack.c.b16 %v459, %v458
        %v472 = vpack.c.b16 %v461, %v460
        %v473 = vpack.c.b16 %v463, %v462
        %v474 = vpack.c.b16 %v465, %v464
        %v475 = vpack.c.b16 %v467, %v466
        %484 = vmatprep.subr.bf16.mxu0 0
        %485 = vmatpush1.bf16.msra.mxu0 %v468
        %486 = vmatprep.subr.bf16.mxu0 0
        %487 = vmatpush1.bf16.msra.mxu0 %v469
        %488 = vmatprep.subr.bf16.mxu0 0
        %489 = vmatpush1.bf16.msra.mxu0 %v470
        %490 = vmatprep.subr.bf16.mxu0 0
        %491 = vmatpush1.bf16.msra.mxu0 %v471
        %492 = vmatprep.subr.bf16.mxu0 0
        %493 = vmatpush1.bf16.msra.mxu0 %v472
        %494 = vmatprep.subr.bf16.mxu0 0
        %495 = vmatpush1.bf16.msra.mxu0 %v473
        %496 = vmatprep.subr.bf16.mxu0 0
        %497 = vmatpush1.bf16.msra.mxu0 %v474
        %498 = vmatprep.subr.bf16.mxu0 0
        %499 = vmatpush1.bf16.msra.mxu0 %v475
        %500 = vmatprep.subr.bf16.mxu0 0
        %501 = vmatpush1.bf16.msra.mxu0 0
        %502 = vmatprep.subr.bf16.mxu0 0
        %503 = vmatpush1.bf16.msra.mxu0 0
        %504 = vmatprep.subr.bf16.mxu0 0
        %505 = vmatpush1.bf16.msra.mxu0 0
        %506 = vmatprep.subr.bf16.mxu0 0
        %507 = vmatpush1.bf16.msra.mxu0 0
        %508 = vmatprep.subr.bf16.mxu0 0
        %509 = vmatpush1.bf16.msra.mxu0 0
        %510 = vmatprep.subr.bf16.mxu0 0
        %511 = vmatpush1.bf16.msra.mxu0 0
        %512 = vmatprep.subr.bf16.mxu0 0
        %513 = vmatpush1.bf16.msra.mxu0 0
        %514 = vmatprep.subr.bf16.mxu0 0
        %515 = vmatpush1.bf16.msra.mxu0 0
        %516 = vmatprep.mubr.bf16.mxu0 0
        %517 = vmatmul.mubr.bf16.gmra.mrb[0].mxu0 %v434
        %v518 = vpop.f32.mrb[0].mxu0
        %v519 = vadd.f32 %v428, %v518
        %v520 = vpop.f32.mrb[0].mxu0
        %v521 = vpop.f32.mrb[0].mxu0
        %v522 = vadd.f32 %v428, %v521
        %v523 = vpop.f32.mrb[0].mxu0
        %524 = vdwg.mxu0
        %v525 = vpack.c.bf16 %v522, %v519
        %v528 = vcombine.high %v519, %v519
        %v530 = vunpack.c.l.s4 1966171168
        %v531 = vunpack.c.0.s8 %v530
        %v532 = vlaneseq
        %v533 = vshrl.u32 %v532, 7
        %v534 = vsub.s32 %v531, %v533
        %v535 = vrot.slane %v519, %v534
        %v537 = vunpack.c.l.s4 1966171168
        %v538 = vunpack.c.0.s8 %v537
        %v539 = vlaneseq
        %v540 = vshrl.u32 %v539, 7
        %v541 = vsub.s32 %v538, %v540
        %v542 = vrot.slane %v528, %v541
        %v543 = vcombine.high %v535, %v535
        %v544 = vcombine.high %v542, %v542
        %v546 = vunpack.c.l.s4 1966171168
        %v547 = vunpack.c.0.s8 %v546
        %v548 = vlaneseq
        %v549 = vshrl.u32 %v548, 7
        %v550 = vsub.s32 %v547, %v549
        %v551 = vrot.slane %v535, %v550
        %v553 = vunpack.c.l.s4 1966171168
        %v554 = vunpack.c.0.s8 %v553
        %v555 = vlaneseq
        %v556 = vshrl.u32 %v555, 7
        %v557 = vsub.s32 %v554, %v556
        %v558 = vrot.slane %v542, %v557
        %v560 = vunpack.c.l.s4 1966171168
        %v561 = vunpack.c.0.s8 %v560
        %v562 = vlaneseq
        %v563 = vshrl.u32 %v562, 7
        %v564 = vsub.s32 %v561, %v563
        %v565 = vrot.slane %v543, %v564
        %v567 = vunpack.c.l.s4 1966171168
        %v568 = vunpack.c.0.s8 %v567
        %v569 = vlaneseq
        %v570 = vshrl.u32 %v569, 7
        %v571 = vsub.s32 %v568, %v570
        %v572 = vrot.slane %v544, %v571
        %v573 = vcombine.high %v551, %v551
        %v574 = vcombine.high %v558, %v558
        %v575 = vcombine.high %v565, %v565
        %v576 = vcombine.high %v572, %v572
        %v577 = vcombine.high %v522, %v522
        %v579 = vunpack.c.l.s4 1966171168
        %v580 = vunpack.c.0.s8 %v579
        %v581 = vlaneseq
        %v582 = vshrl.u32 %v581, 7
        %v583 = vsub.s32 %v580, %v582
        %v584 = vrot.slane %v522, %v583
        %v586 = vunpack.c.l.s4 1966171168
        %v587 = vunpack.c.0.s8 %v586
        %v588 = vlaneseq
        %v589 = vshrl.u32 %v588, 7
        %v590 = vsub.s32 %v587, %v589
        %v591 = vrot.slane %v577, %v590
        %v592 = vcombine.high %v584, %v584
        %v593 = vcombine.high %v591, %v591
        %v595 = vunpack.c.l.s4 1966171168
        %v596 = vunpack.c.0.s8 %v595
        %v597 = vlaneseq
        %v598 = vshrl.u32 %v597, 7
        %v599 = vsub.s32 %v596, %v598
        %v600 = vrot.slane %v584, %v599
        %v602 = vunpack.c.l.s4 1966171168
        %v603 = vunpack.c.0.s8 %v602
        %v604 = vlaneseq
        %v605 = vshrl.u32 %v604, 7
        %v606 = vsub.s32 %v603, %v605
        %v607 = vrot.slane %v591, %v606
        %v609 = vunpack.c.l.s4 1966171168
        %v610 = vunpack.c.0.s8 %v609
        %v611 = vlaneseq
        %v612 = vshrl.u32 %v611, 7
        %v613 = vsub.s32 %v610, %v612
        %v614 = vrot.slane %v592, %v613
        %v616 = vunpack.c.l.s4 1966171168
        %v617 = vunpack.c.0.s8 %v616
        %v618 = vlaneseq
        %v619 = vshrl.u32 %v618, 7
        %v620 = vsub.s32 %v617, %v619
        %v621 = vrot.slane %v593, %v620
        %v622 = vcombine.high %v600, %v600
        %v623 = vcombine.high %v607, %v607
        %v624 = vcombine.high %v614, %v614
        %v625 = vcombine.high %v621, %v621
        %v626 = vld [vmem:[%s5] sm:$0xf]
        %v627 = vld [vmem:[%s5 + $0x4] sm:$0xf]
        %v628 = vld [vmem:[%s5 + $0x8] sm:$0xf]
        %v629 = vld [vmem:[%s5 + $0xc] sm:$0xf]
        %v630 = vld [vmem:[%s5 + $0x10] sm:$0xf]
        %v631 = vld [vmem:[%s5 + $0x14] sm:$0xf]
        %v632 = vld [vmem:[%s5 + $0x18] sm:$0xf]
        %v633 = vld [vmem:[%s5 + $0x1c] sm:$0xf]
        %v634 = vld [vmem:[%s5 + $0x20] sm:$0xf]
        %v635 = vld [vmem:[%s5 + $0x24] sm:$0xf]
        %v636 = vld [vmem:[%s5 + $0x28] sm:$0xf]
        %v637 = vld [vmem:[%s5 + $0x2c] sm:$0xf]
        %v638 = vld [vmem:[%s5 + $0x30] sm:$0xf]
        %v639 = vld [vmem:[%s5 + $0x34] sm:$0xf]
        %v640 = vld [vmem:[%s5 + $0x38] sm:$0xf]
        %v641 = vld [vmem:[%s5 + $0x3c] sm:$0xf]
        %v642 = vld [vmem:[%s5 + $0x40] sm:$0xf]
        %v643 = vld [vmem:[%s5 + $0x44] sm:$0xf]
        %v644 = vld [vmem:[%s5 + $0x48] sm:$0xf]
        %v645 = vld [vmem:[%s5 + $0x4c] sm:$0xf]
        %v646 = vld [vmem:[%s5 + $0x50] sm:$0xf]
        %v647 = vld [vmem:[%s5 + $0x54] sm:$0xf]
        %v648 = vld [vmem:[%s5 + $0x58] sm:$0xf]
        %v649 = vld [vmem:[%s5 + $0x5c] sm:$0xf]
        %v650 = vld [vmem:[%s5 + $0x60] sm:$0xf]
        %v651 = vld [vmem:[%s5 + $0x64] sm:$0xf]
        %v652 = vld [vmem:[%s5 + $0x68] sm:$0xf]
        %v653 = vld [vmem:[%s5 + $0x6c] sm:$0xf]
        %v654 = vld [vmem:[%s5 + $0x70] sm:$0xf]
        %v655 = vld [vmem:[%s5 + $0x74] sm:$0xf]
        %v656 = vld [vmem:[%s5 + $0x78] sm:$0xf]
        %v657 = vld [vmem:[%s5 + $0x7c] sm:$0xf]
        %v658 = vunpack.c.l.bf16 %v626
        %v659 = vunpack.c.l.bf16 %v627
        %v660 = vunpack.c.l.bf16 %v628
        %v661 = vunpack.c.l.bf16 %v629
        %v662 = vunpack.c.l.bf16 %v630
        %v663 = vunpack.c.l.bf16 %v631
        %v664 = vunpack.c.l.bf16 %v632
        %v665 = vunpack.c.l.bf16 %v633
        %v666 = vunpack.c.l.bf16 %v634
        %v667 = vunpack.c.l.bf16 %v635
        %v668 = vunpack.c.l.bf16 %v636
        %v669 = vunpack.c.l.bf16 %v637
        %v670 = vunpack.c.l.bf16 %v638
        %v671 = vunpack.c.l.bf16 %v639
        %v672 = vunpack.c.l.bf16 %v640
        %v673 = vunpack.c.l.bf16 %v641
        %v674 = vunpack.c.l.bf16 %v642
        %v675 = vunpack.c.l.bf16 %v643
        %v676 = vunpack.c.l.bf16 %v644
        %v677 = vunpack.c.l.bf16 %v645
        %v678 = vunpack.c.l.bf16 %v646
        %v679 = vunpack.c.l.bf16 %v647
        %v680 = vunpack.c.l.bf16 %v648
        %v681 = vunpack.c.l.bf16 %v649
        %v682 = vunpack.c.l.bf16 %v650
        %v683 = vunpack.c.l.bf16 %v651
        %v684 = vunpack.c.l.bf16 %v652
        %v685 = vunpack.c.l.bf16 %v653
        %v686 = vunpack.c.l.bf16 %v654
        %v687 = vunpack.c.l.bf16 %v655
        %v688 = vunpack.c.l.bf16 %v656
        %v689 = vunpack.c.l.bf16 %v657
        %v690 = vlaneseq
        %v691 = vshrl.u32 %v690, 7
        %v692 = vsub.s32 0, %v691
        %v693 = vrot.slane %v551, %v692
        %v694 = vlaneseq
        %v695 = vshrl.u32 %v694, 7
        %v696 = vsub.s32 0, %v695
        %v697 = vrot.slane %v565, %v696
        %v698 = vlaneseq
        %v699 = vshrl.u32 %v698, 7
        %v700 = vsub.s32 0, %v699
        %v701 = vrot.slane %v573, %v700
        %v702 = vlaneseq
        %v703 = vshrl.u32 %v702, 7
        %v704 = vsub.s32 0, %v703
        %v705 = vrot.slane %v575, %v704
        %v706 = vlaneseq
        %v707 = vshrl.u32 %v706, 7
        %v708 = vsub.s32 0, %v707
        %v709 = vrot.slane %v558, %v708
        %v710 = vlaneseq
        %v711 = vshrl.u32 %v710, 7
        %v712 = vsub.s32 0, %v711
        %v713 = vrot.slane %v572, %v712
        %v714 = vlaneseq
        %v715 = vshrl.u32 %v714, 7
        %v716 = vsub.s32 0, %v715
        %v717 = vrot.slane %v574, %v716
        %v718 = vlaneseq
        %v719 = vshrl.u32 %v718, 7
        %v720 = vsub.s32 0, %v719
        %v721 = vrot.slane %v576, %v720
        %v722 = vlaneseq
        %v723 = vshrl.u32 %v722, 7
        %v724 = vsub.s32 0, %v723
        %v725 = vrot.slane %v600, %v724
        %v726 = vlaneseq
        %v727 = vshrl.u32 %v726, 7
        %v728 = vsub.s32 0, %v727
        %v729 = vrot.slane %v614, %v728
        %v730 = vlaneseq
        %v731 = vshrl.u32 %v730, 7
        %v732 = vsub.s32 0, %v731
        %v733 = vrot.slane %v622, %v732
        %v734 = vlaneseq
        %v735 = vshrl.u32 %v734, 7
        %v736 = vsub.s32 0, %v735
        %v737 = vrot.slane %v624, %v736
        %v738 = vlaneseq
        %v739 = vshrl.u32 %v738, 7
        %v740 = vsub.s32 0, %v739
        %v741 = vrot.slane %v607, %v740
        %v742 = vlaneseq
        %v743 = vshrl.u32 %v742, 7
        %v744 = vsub.s32 0, %v743
        %v745 = vrot.slane %v621, %v744
        %v746 = vlaneseq
        %v747 = vshrl.u32 %v746, 7
        %v748 = vsub.s32 0, %v747
        %v749 = vrot.slane %v623, %v748
        %v750 = vlaneseq
        %v751 = vshrl.u32 %v750, 7
        %v752 = vsub.s32 0, %v751
        %v753 = vrot.slane %v625, %v752
        %v770 = vmul.f32 %v693, %v658
        %v771 = vmul.f32 %v693, %v659
        %v772 = vmul.f32 %v697, %v660
        %v773 = vmul.f32 %v697, %v661
        %v774 = vmul.f32 %v701, %v662
        %v775 = vmul.f32 %v701, %v663
        %v776 = vmul.f32 %v705, %v664
        %v777 = vmul.f32 %v705, %v665
        %v778 = vmul.f32 %v709, %v666
        %v779 = vmul.f32 %v709, %v667
        %v780 = vmul.f32 %v713, %v668
        %v781 = vmul.f32 %v713, %v669
        %v782 = vmul.f32 %v717, %v670
        %v783 = vmul.f32 %v717, %v671
        %v784 = vmul.f32 %v721, %v672
        %v785 = vmul.f32 %v721, %v673
        %v786 = vmul.f32 %v725, %v674
        %v787 = vmul.f32 %v725, %v675
        %v788 = vmul.f32 %v729, %v676
        %v789 = vmul.f32 %v729, %v677
        %v790 = vmul.f32 %v733, %v678
        %v791 = vmul.f32 %v733, %v679
        %v792 = vmul.f32 %v737, %v680
        %v793 = vmul.f32 %v737, %v681
        %v794 = vmul.f32 %v741, %v682
        %v795 = vmul.f32 %v741, %v683
        %v796 = vmul.f32 %v745, %v684
        %v797 = vmul.f32 %v745, %v685
        %v798 = vmul.f32 %v749, %v686
        %v799 = vmul.f32 %v749, %v687
        %v800 = vmul.f32 %v753, %v688
        %v801 = vmul.f32 %v753, %v689
        %vm802 = vcmask 130048
        %v803 = vsel %vm802, %v770, 0.0
        %804 = vadd.xlane.f32.xlu0 %v803
        %v805 = vpop.xlane.xlu0 %804
        %v806 = vsel %vm802, %v771, 0.0
        %807 = vadd.xlane.f32.xlu0 %v806
        %v808 = vpop.xlane.xlu0 %807
        %v809 = vsel %vm802, %v772, 0.0
        %810 = vadd.xlane.f32.xlu0 %v809
        %v811 = vpop.xlane.xlu0 %810
        %v812 = vsel %vm802, %v773, 0.0
        %813 = vadd.xlane.f32.xlu0 %v812
        %v814 = vpop.xlane.xlu0 %813
        %v815 = vsel %vm802, %v774, 0.0
        %816 = vadd.xlane.f32.xlu0 %v815
        %v817 = vpop.xlane.xlu0 %816
        %v818 = vsel %vm802, %v775, 0.0
        %819 = vadd.xlane.f32.xlu0 %v818
        %v820 = vpop.xlane.xlu0 %819
        %v821 = vsel %vm802, %v776, 0.0
        %822 = vadd.xlane.f32.xlu0 %v821
        %v823 = vpop.xlane.xlu0 %822
        %v824 = vsel %vm802, %v777, 0.0
        %825 = vadd.xlane.f32.xlu0 %v824
        %v826 = vpop.xlane.xlu0 %825
        %v827 = vsel %vm802, %v778, 0.0
        %828 = vadd.xlane.f32.xlu0 %v827
        %v829 = vpop.xlane.xlu0 %828
        %v830 = vsel %vm802, %v779, 0.0
        %831 = vadd.xlane.f32.xlu0 %v830
        %v832 = vpop.xlane.xlu0 %831
        %v833 = vsel %vm802, %v780, 0.0
        %834 = vadd.xlane.f32.xlu0 %v833
        %v835 = vpop.xlane.xlu0 %834
        %v836 = vsel %vm802, %v781, 0.0
        %837 = vadd.xlane.f32.xlu0 %v836
        %v838 = vpop.xlane.xlu0 %837
        %v839 = vsel %vm802, %v782, 0.0
        %840 = vadd.xlane.f32.xlu0 %v839
        %v841 = vpop.xlane.xlu0 %840
        %v842 = vsel %vm802, %v783, 0.0
        %843 = vadd.xlane.f32.xlu0 %v842
        %v844 = vpop.xlane.xlu0 %843
        %v845 = vsel %vm802, %v784, 0.0
        %846 = vadd.xlane.f32.xlu0 %v845
        %v847 = vpop.xlane.xlu0 %846
        %v848 = vsel %vm802, %v785, 0.0
        %849 = vadd.xlane.f32.xlu0 %v848
        %v850 = vpop.xlane.xlu0 %849
        %v851 = vsel %vm802, %v786, 0.0
        %852 = vadd.xlane.f32.xlu0 %v851
        %v853 = vpop.xlane.xlu0 %852
        %v854 = vsel %vm802, %v787, 0.0
        %855 = vadd.xlane.f32.xlu0 %v854
        %v856 = vpop.xlane.xlu0 %855
        %v857 = vsel %vm802, %v788, 0.0
        %858 = vadd.xlane.f32.xlu0 %v857
        %v859 = vpop.xlane.xlu0 %858
        %v860 = vsel %vm802, %v789, 0.0
        %861 = vadd.xlane.f32.xlu0 %v860
        %v862 = vpop.xlane.xlu0 %861
        %v863 = vsel %vm802, %v790, 0.0
        %864 = vadd.xlane.f32.xlu0 %v863
        %v865 = vpop.xlane.xlu0 %864
        %v866 = vsel %vm802, %v791, 0.0
        %867 = vadd.xlane.f32.xlu0 %v866
        %v868 = vpop.xlane.xlu0 %867
        %v869 = vsel %vm802, %v792, 0.0
        %870 = vadd.xlane.f32.xlu0 %v869
        %v871 = vpop.xlane.xlu0 %870
        %v872 = vsel %vm802, %v793, 0.0
        %873 = vadd.xlane.f32.xlu0 %v872
        %v874 = vpop.xlane.xlu0 %873
        %v875 = vsel %vm802, %v794, 0.0
        %876 = vadd.xlane.f32.xlu0 %v875
        %v877 = vpop.xlane.xlu0 %876
        %v878 = vsel %vm802, %v795, 0.0
        %879 = vadd.xlane.f32.xlu0 %v878
        %v880 = vpop.xlane.xlu0 %879
        %v881 = vsel %vm802, %v796, 0.0
        %882 = vadd.xlane.f32.xlu0 %v881
        %v883 = vpop.xlane.xlu0 %882
        %v884 = vsel %vm802, %v797, 0.0
        %885 = vadd.xlane.f32.xlu0 %v884
        %v886 = vpop.xlane.xlu0 %885
        %v887 = vsel %vm802, %v798, 0.0
        %888 = vadd.xlane.f32.xlu0 %v887
        %v889 = vpop.xlane.xlu0 %888
        %v890 = vsel %vm802, %v799, 0.0
        %891 = vadd.xlane.f32.xlu0 %v890
        %v892 = vpop.xlane.xlu0 %891
        %v893 = vsel %vm802, %v800, 0.0
        %894 = vadd.xlane.f32.xlu0 %v893
        %v895 = vpop.xlane.xlu0 %894
        %v896 = vsel %vm802, %v801, 0.0
        %897 = vadd.xlane.f32.xlu0 %v896
        %v898 = vpop.xlane.xlu0 %897
        %900 = vrot.lane.b32.xlu0 %v525, 112
        %v901 = vpop.permute.xlu0 %900
        %v934 = vlaneseq
        %v935 = vand.u32 %v934, 127
        %v936 = vlaneseq
        %v937 = vshrl.u32 %v936, 7
        %v938 = vsub.s32 %v935, %v937
        %v939 = vrot.slane %v805, %v938
        %v940 = vadd.s32 %v935, 4294967288
        %v941 = vlaneseq
        %v942 = vshrl.u32 %v941, 7
        %v943 = vsub.s32 %v940, %v942
        %v944 = vrot.slane %v808, %v943
        %vm945 = vcmask 130112
        %v946 = vsel %vm945, %v944, %v939
        %v947 = vlaneseq
        %v948 = vshrl.u32 %v947, 7
        %v949 = vsub.s32 %v935, %v948
        %v950 = vrot.slane %v811, %v949
        %v951 = vlaneseq
        %v952 = vshrl.u32 %v951, 7
        %v953 = vsub.s32 %v940, %v952
        %v954 = vrot.slane %v814, %v953
        %v955 = vsel %vm945, %v954, %v950
        %v956 = vlaneseq
        %v957 = vshrl.u32 %v956, 7
        %v958 = vsub.s32 %v935, %v957
        %v959 = vrot.slane %v817, %v958
        %v960 = vlaneseq
        %v961 = vshrl.u32 %v960, 7
        %v962 = vsub.s32 %v940, %v961
        %v963 = vrot.slane %v820, %v962
        %v964 = vsel %vm945, %v963, %v959
        %v965 = vlaneseq
        %v966 = vshrl.u32 %v965, 7
        %v967 = vsub.s32 %v935, %v966
        %v968 = vrot.slane %v823, %v967
        %v969 = vlaneseq
        %v970 = vshrl.u32 %v969, 7
        %v971 = vsub.s32 %v940, %v970
        %v972 = vrot.slane %v826, %v971
        %v973 = vsel %vm945, %v972, %v968
        %v974 = vlaneseq
        %v975 = vshrl.u32 %v974, 7
        %v976 = vsub.s32 %v935, %v975
        %v977 = vrot.slane %v829, %v976
        %v978 = vlaneseq
        %v979 = vshrl.u32 %v978, 7
        %v980 = vsub.s32 %v940, %v979
        %v981 = vrot.slane %v832, %v980
        %v982 = vsel %vm945, %v981, %v977
        %v983 = vlaneseq
        %v984 = vshrl.u32 %v983, 7
        %v985 = vsub.s32 %v935, %v984
        %v986 = vrot.slane %v835, %v985
        %v987 = vlaneseq
        %v988 = vshrl.u32 %v987, 7
        %v989 = vsub.s32 %v940, %v988
        %v990 = vrot.slane %v838, %v989
        %v991 = vsel %vm945, %v990, %v986
        %v992 = vlaneseq
        %v993 = vshrl.u32 %v992, 7
        %v994 = vsub.s32 %v935, %v993
        %v995 = vrot.slane %v841, %v994
        %v996 = vlaneseq
        %v997 = vshrl.u32 %v996, 7
        %v998 = vsub.s32 %v940, %v997
        %v999 = vrot.slane %v844, %v998
        %v1000 = vsel %vm945, %v999, %v995
        %v1001 = vlaneseq
        %v1002 = vshrl.u32 %v1001, 7
        %v1003 = vsub.s32 %v935, %v1002
        %v1004 = vrot.slane %v847, %v1003
        %v1005 = vlaneseq
        %v1006 = vshrl.u32 %v1005, 7
        %v1007 = vsub.s32 %v940, %v1006
        %v1008 = vrot.slane %v850, %v1007
        %v1009 = vsel %vm945, %v1008, %v1004
        %v1010 = vlaneseq
        %v1011 = vshrl.u32 %v1010, 7
        %v1012 = vsub.s32 %v935, %v1011
        %v1013 = vrot.slane %v853, %v1012
        %v1014 = vlaneseq
        %v1015 = vshrl.u32 %v1014, 7
        %v1016 = vsub.s32 %v940, %v1015
        %v1017 = vrot.slane %v856, %v1016
        %v1018 = vsel %vm945, %v1017, %v1013
        %v1019 = vlaneseq
        %v1020 = vshrl.u32 %v1019, 7
        %v1021 = vsub.s32 %v935, %v1020
        %v1022 = vrot.slane %v859, %v1021
        %v1023 = vlaneseq
        %v1024 = vshrl.u32 %v1023, 7
        %v1025 = vsub.s32 %v940, %v1024
        %v1026 = vrot.slane %v862, %v1025
        %v1027 = vsel %vm945, %v1026, %v1022
        %v1028 = vlaneseq
        %v1029 = vshrl.u32 %v1028, 7
        %v1030 = vsub.s32 %v935, %v1029
        %v1031 = vrot.slane %v865, %v1030
        %v1032 = vlaneseq
        %v1033 = vshrl.u32 %v1032, 7
        %v1034 = vsub.s32 %v940, %v1033
        %v1035 = vrot.slane %v868, %v1034
        %v1036 = vsel %vm945, %v1035, %v1031
        %v1037 = vlaneseq
        %v1038 = vshrl.u32 %v1037, 7
        %v1039 = vsub.s32 %v935, %v1038
        %v1040 = vrot.slane %v871, %v1039
        %v1041 = vlaneseq
        %v1042 = vshrl.u32 %v1041, 7
        %v1043 = vsub.s32 %v940, %v1042
        %v1044 = vrot.slane %v874, %v1043
        %v1045 = vsel %vm945, %v1044, %v1040
        %v1046 = vlaneseq
        %v1047 = vshrl.u32 %v1046, 7
        %v1048 = vsub.s32 %v935, %v1047
        %v1049 = vrot.slane %v877, %v1048
        %v1050 = vlaneseq
        %v1051 = vshrl.u32 %v1050, 7
        %v1052 = vsub.s32 %v940, %v1051
        %v1053 = vrot.slane %v880, %v1052
        %v1054 = vsel %vm945, %v1053, %v1049
        %v1055 = vlaneseq
        %v1056 = vshrl.u32 %v1055, 7
        %v1057 = vsub.s32 %v935, %v1056
        %v1058 = vrot.slane %v883, %v1057
        %v1059 = vlaneseq
        %v1060 = vshrl.u32 %v1059, 7
        %v1061 = vsub.s32 %v940, %v1060
        %v1062 = vrot.slane %v886, %v1061
        %v1063 = vsel %vm945, %v1062, %v1058
        %v1064 = vlaneseq
        %v1065 = vshrl.u32 %v1064, 7
        %v1066 = vsub.s32 %v935, %v1065
        %v1067 = vrot.slane %v889, %v1066
        %v1068 = vlaneseq
        %v1069 = vshrl.u32 %v1068, 7
        %v1070 = vsub.s32 %v940, %v1069
        %v1071 = vrot.slane %v892, %v1070
        %v1072 = vsel %vm945, %v1071, %v1067
        %v1073 = vlaneseq
        %v1074 = vshrl.u32 %v1073, 7
        %v1075 = vsub.s32 %v935, %v1074
        %v1076 = vrot.slane %v895, %v1075
        %v1077 = vlaneseq
        %v1078 = vshrl.u32 %v1077, 7
        %v1079 = vsub.s32 %v940, %v1078
        %v1080 = vrot.slane %v898, %v1079
        %v1081 = vsel %vm945, %v1080, %v1076
        %vm1082 = vcmask 1041409
        %v1083 = vsel %vm1082, %v955, %v946
        %vm1084 = vcmask 1042434
        %v1085 = vsel %vm1084, %v964, %v1083
        %vm1086 = vcmask 1043459
        %v1087 = vsel %vm1086, %v973, %v1085
        %vm1088 = vcmask 1044484
        %v1089 = vsel %vm1088, %v982, %v1087
        %vm1090 = vcmask 1045509
        %v1091 = vsel %vm1090, %v991, %v1089
        %vm1092 = vcmask 1046534
        %v1093 = vsel %vm1092, %v1000, %v1091
        %vm1094 = vcmask 1047559
        %v1095 = vsel %vm1094, %v1009, %v1093
        %v1096 = vsel %vm1082, %v1027, %v1018
        %v1097 = vsel %vm1084, %v1036, %v1096
        %v1098 = vsel %vm1086, %v1045, %v1097
        %v1099 = vsel %vm1088, %v1054, %v1098
        %v1100 = vsel %vm1090, %v1063, %v1099
        %v1101 = vsel %vm1092, %v1072, %v1100
        %v1102 = vsel %vm1094, %v1081, %v1101
        %v1106 = vsel %vm802, %v525, 0
        %v1109 = vsel %vm802, %v901, 0
        %1111 = vmatprep.subr.bf16.mxu0 0
        %1112 = vmatpush1.bf16.xpose.msra.mxu0 %v1109
        %1113 = vmatprep.subr.bf16.mxu0 0
        %1114 = vmatpush1.bf16.xpose.msra.mxu0 0
        %1115 = vmatprep.subr.bf16.mxu0 0
        %1116 = vmatpush1.bf16.xpose.msra.mxu0 0
        %1117 = vmatprep.subr.bf16.mxu0 0
        %1118 = vmatpush1.bf16.xpose.msra.mxu0 0
        %1119 = vmatprep.subr.bf16.mxu0 0
        %1120 = vmatpush1.bf16.xpose.msra.mxu0 0
        %1121 = vmatprep.subr.bf16.mxu0 0
        %1122 = vmatpush1.bf16.xpose.msra.mxu0 0
        %1123 = vmatprep.subr.bf16.mxu0 0
        %1124 = vmatpush1.bf16.xpose.msra.mxu0 0
        %1125 = vmatprep.subr.bf16.mxu0 0
        %1126 = vmatpush1.bf16.xpose.msra.mxu0 0
        %1127 = vmatprep.subr.bf16.mxu0 0
        %1128 = vmatpush1.bf16.xpose.msra.mxu0 0
        %1129 = vmatprep.subr.bf16.mxu0 0
        %1130 = vmatpush1.bf16.xpose.msra.mxu0 0
        %1131 = vmatprep.subr.bf16.mxu0 0
        %1132 = vmatpush1.bf16.xpose.msra.mxu0 0
        %1133 = vmatprep.subr.bf16.mxu0 0
        %1134 = vmatpush1.bf16.xpose.msra.mxu0 0
        %1135 = vmatprep.subr.bf16.mxu0 0
        %1136 = vmatpush1.bf16.xpose.msra.mxu0 0
        %1137 = vmatprep.subr.bf16.mxu0 0
        %1138 = vmatpush1.bf16.xpose.msra.mxu0 0
        %1139 = vmatprep.subr.bf16.mxu0 0
        %1140 = vmatpush1.bf16.xpose.msra.mxu0 0
        %1141 = vmatprep.subr.bf16.mxu0 0
        %1142 = vmatpush1.bf16.xpose.msra.mxu0 0
        %1143 = vmatprep.mubr.bf16.mxu0 0
        %1144 = vmatmul.mubr.bf16.gmra.mrb[0].mxu0 %v1106
        %v1145 = vpop.f32.mrb[0].mxu0
        %v1146 = vadd.f32 %v1095, %v1145
        %v1147 = vpop.f32.mrb[0].mxu0
        %v1148 = vpop.f32.mrb[0].mxu0
        %v1149 = vadd.f32 %v1102, %v1148
        %v1150 = vpop.f32.mrb[0].mxu0
        %1151 = vdwg.mxu0
        %v1152 = vmul.f32 %v1146, 0.088388346
        %v1153 = vmul.f32 %v1149, 0.088388346
        %v1154 = vld [vmem:[%s403] sm:$0x3]
        %v1155 = vld [vmem:[%s403 + $0x2] sm:$0x3]
        %v1156 = vunpack.c.0.s8 %v1154
        %v1157 = vunpack.c.0.s8 %v1155
        %v1158 = vcvt.s32.f32 %v1156
        %v1159 = vcvt.s32.f32 %v1157
        %v1160 = vsub.f32 %v1158, 1.0
        %v1161 = vsub.f32 %v1159, 1.0
        %v1162 = vmul.f32 %v1160, 1e+30
        %v1163 = vmul.f32 %v1161, 1e+30
        %v1164 = vadd.f32 %v1152, %v1162
        %v1165 = vadd.f32 %v1153, %v1163
        %v1166 = vsel %vm802, %v1164, -inf
        %1167 = vmax.xlane.f32.xlu0 %v1166
        %v1168 = vpop.xlane.xlu0 %1167
        %v1169 = vsel %vm802, %v1165, -inf
        %1170 = vmax.xlane.f32.xlu0 %v1169
        %v1171 = vpop.xlane.xlu0 %1170
        %v1172 = vsub.f32 %v1164, %v1168
        %v1173 = vsub.f32 %v1165, %v1171
        %v1174 = vmul.f32 %v1172, 1.442695
        %v1175 = vpow.pop %v1174
        %v1176 = vmul.f32 %v1173, 1.442695
        %v1177 = vpow.pop %v1176
        %v1178 = vsel %vm802, %v1175, 0.0
        %1179 = vadd.xlane.f32.xlu0 %v1178
        %v1180 = vpop.xlane.xlu0 %1179
        %v1181 = vsel %vm802, %v1177, 0.0
        %1182 = vadd.xlane.f32.xlu0 %v1181
        %v1183 = vpop.xlane.xlu0 %1182
        %v1184 = vpack.c.bf16 %v1177, %v1175
        %v1185 = vlaneseq
        %v1186 = vshrl.u32 %v1185, 7
        %v1187 = vsub.s32 0, %v1186
        %v1188 = vrot.slane %v1175, %v1187
        %1190 = vbcast.lane.b32.xlu0 %v1188, 256
        %v1191 = vpop.permute.xlu0 %1190
        %s1193 = sor.u32 256, 8
        %1194 = vbcast.lane.b32.xlu0 %v1188, %s1193
        %v1195 = vpop.permute.xlu0 %1194
        %v1196 = vlaneseq
        %v1197 = vshrl.u32 %v1196, 7
        %v1198 = vsub.s32 1, %v1197
        %v1199 = vrot.slane %v1175, %v1198
        %1201 = vbcast.lane.b32.xlu0 %v1199, 256
        %v1202 = vpop.permute.xlu0 %1201
        %s1204 = sor.u32 256, 8
        %1205 = vbcast.lane.b32.xlu0 %v1199, %s1204
        %v1206 = vpop.permute.xlu0 %1205
        %v1207 = vlaneseq
        %v1208 = vshrl.u32 %v1207, 7
        %v1209 = vsub.s32 2, %v1208
        %v1210 = vrot.slane %v1175, %v1209
        %1212 = vbcast.lane.b32.xlu0 %v1210, 256
        %v1213 = vpop.permute.xlu0 %1212
        %s1215 = sor.u32 256, 8
        %1216 = vbcast.lane.b32.xlu0 %v1210, %s1215
        %v1217 = vpop.permute.xlu0 %1216
        %v1218 = vlaneseq
        %v1219 = vshrl.u32 %v1218, 7
        %v1220 = vsub.s32 3, %v1219
        %v1221 = vrot.slane %v1175, %v1220
        %1223 = vbcast.lane.b32.xlu0 %v1221, 256
        %v1224 = vpop.permute.xlu0 %1223
        %s1226 = sor.u32 256, 8
        %1227 = vbcast.lane.b32.xlu0 %v1221, %s1226
        %v1228 = vpop.permute.xlu0 %1227
        %v1229 = vlaneseq
        %v1230 = vshrl.u32 %v1229, 7
        %v1231 = vsub.s32 4, %v1230
        %v1232 = vrot.slane %v1175, %v1231
        %1234 = vbcast.lane.b32.xlu0 %v1232, 256
        %v1235 = vpop.permute.xlu0 %1234
        %s1237 = sor.u32 256, 8
        %1238 = vbcast.lane.b32.xlu0 %v1232, %s1237
        %v1239 = vpop.permute.xlu0 %1238
        %v1240 = vlaneseq
        %v1241 = vshrl.u32 %v1240, 7
        %v1242 = vsub.s32 5, %v1241
        %v1243 = vrot.slane %v1175, %v1242
        %1245 = vbcast.lane.b32.xlu0 %v1243, 256
        %v1246 = vpop.permute.xlu0 %1245
        %s1248 = sor.u32 256, 8
        %1249 = vbcast.lane.b32.xlu0 %v1243, %s1248
        %v1250 = vpop.permute.xlu0 %1249
        %v1251 = vlaneseq
        %v1252 = vshrl.u32 %v1251, 7
        %v1253 = vsub.s32 6, %v1252
        %v1254 = vrot.slane %v1175, %v1253
        %1256 = vbcast.lane.b32.xlu0 %v1254, 256
        %v1257 = vpop.permute.xlu0 %1256
        %s1259 = sor.u32 256, 8
        %1260 = vbcast.lane.b32.xlu0 %v1254, %s1259
        %v1261 = vpop.permute.xlu0 %1260
        %v1262 = vlaneseq
        %v1263 = vshrl.u32 %v1262, 7
        %v1264 = vsub.s32 7, %v1263
        %v1265 = vrot.slane %v1175, %v1264
        %1267 = vbcast.lane.b32.xlu0 %v1265, 256
        %v1268 = vpop.permute.xlu0 %1267
        %s1270 = sor.u32 256, 8
        %1271 = vbcast.lane.b32.xlu0 %v1265, %s1270
        %v1272 = vpop.permute.xlu0 %1271
        %v1273 = vlaneseq
        %v1274 = vshrl.u32 %v1273, 7
        %v1275 = vsub.s32 0, %v1274
        %v1276 = vrot.slane %v1177, %v1275
        %1278 = vbcast.lane.b32.xlu0 %v1276, 256
        %v1279 = vpop.permute.xlu0 %1278
        %s1281 = sor.u32 256, 8
        %1282 = vbcast.lane.b32.xlu0 %v1276, %s1281
        %v1283 = vpop.permute.xlu0 %1282
        %v1284 = vlaneseq
        %v1285 = vshrl.u32 %v1284, 7
        %v1286 = vsub.s32 1, %v1285
        %v1287 = vrot.slane %v1177, %v1286
        %1289 = vbcast.lane.b32.xlu0 %v1287, 256
        %v1290 = vpop.permute.xlu0 %1289
        %s1292 = sor.u32 256, 8
        %1293 = vbcast.lane.b32.xlu0 %v1287, %s1292
        %v1294 = vpop.permute.xlu0 %1293
        %v1295 = vlaneseq
        %v1296 = vshrl.u32 %v1295, 7
        %v1297 = vsub.s32 2, %v1296
        %v1298 = vrot.slane %v1177, %v1297
        %1300 = vbcast.lane.b32.xlu0 %v1298, 256
        %v1301 = vpop.permute.xlu0 %1300
        %s1303 = sor.u32 256, 8
        %1304 = vbcast.lane.b32.xlu0 %v1298, %s1303
        %v1305 = vpop.permute.xlu0 %1304
        %v1306 = vlaneseq
        %v1307 = vshrl.u32 %v1306, 7
        %v1308 = vsub.s32 3, %v1307
        %v1309 = vrot.slane %v1177, %v1308
        %1311 = vbcast.lane.b32.xlu0 %v1309, 256
        %v1312 = vpop.permute.xlu0 %1311
        %s1314 = sor.u32 256, 8
        %1315 = vbcast.lane.b32.xlu0 %v1309, %s1314
        %v1316 = vpop.permute.xlu0 %1315
        %v1317 = vlaneseq
        %v1318 = vshrl.u32 %v1317, 7
        %v1319 = vsub.s32 4, %v1318
        %v1320 = vrot.slane %v1177, %v1319
        %1322 = vbcast.lane.b32.xlu0 %v1320, 256
        %v1323 = vpop.permute.xlu0 %1322
        %s1325 = sor.u32 256, 8
        %1326 = vbcast.lane.b32.xlu0 %v1320, %s1325
        %v1327 = vpop.permute.xlu0 %1326
        %v1328 = vlaneseq
        %v1329 = vshrl.u32 %v1328, 7
        %v1330 = vsub.s32 5, %v1329
        %v1331 = vrot.slane %v1177, %v1330
        %1333 = vbcast.lane.b32.xlu0 %v1331, 256
        %v1334 = vpop.permute.xlu0 %1333
        %s1336 = sor.u32 256, 8
        %1337 = vbcast.lane.b32.xlu0 %v1331, %s1336
        %v1338 = vpop.permute.xlu0 %1337
        %v1339 = vlaneseq
        %v1340 = vshrl.u32 %v1339, 7
        %v1341 = vsub.s32 6, %v1340
        %v1342 = vrot.slane %v1177, %v1341
        %1344 = vbcast.lane.b32.xlu0 %v1342, 256
        %v1345 = vpop.permute.xlu0 %1344
        %s1347 = sor.u32 256, 8
        %1348 = vbcast.lane.b32.xlu0 %v1342, %s1347
        %v1349 = vpop.permute.xlu0 %1348
        %v1350 = vlaneseq
        %v1351 = vshrl.u32 %v1350, 7
        %v1352 = vsub.s32 7, %v1351
        %v1353 = vrot.slane %v1177, %v1352
        %1355 = vbcast.lane.b32.xlu0 %v1353, 256
        %v1356 = vpop.permute.xlu0 %1355
        %s1358 = sor.u32 256, 8
        %1359 = vbcast.lane.b32.xlu0 %v1353, %s1358
        %v1360 = vpop.permute.xlu0 %1359
        %v1361 = vld [vmem:[%s6] sm:$0xf]
        %v1362 = vld [vmem:[%s6 + $0x4] sm:$0xf]
        %v1363 = vld [vmem:[%s6 + $0x8] sm:$0xf]
        %v1364 = vld [vmem:[%s6 + $0xc] sm:$0xf]
        %v1365 = vld [vmem:[%s6 + $0x10] sm:$0xf]
        %v1366 = vld [vmem:[%s6 + $0x14] sm:$0xf]
        %v1367 = vld [vmem:[%s6 + $0x18] sm:$0xf]
        %v1368 = vld [vmem:[%s6 + $0x1c] sm:$0xf]
        %v1369 = vld [vmem:[%s6 + $0x20] sm:$0xf]
        %v1370 = vld [vmem:[%s6 + $0x24] sm:$0xf]
        %v1371 = vld [vmem:[%s6 + $0x28] sm:$0xf]
        %v1372 = vld [vmem:[%s6 + $0x2c] sm:$0xf]
        %v1373 = vld [vmem:[%s6 + $0x30] sm:$0xf]
        %v1374 = vld [vmem:[%s6 + $0x34] sm:$0xf]
        %v1375 = vld [vmem:[%s6 + $0x38] sm:$0xf]
        %v1376 = vld [vmem:[%s6 + $0x3c] sm:$0xf]
        %v1377 = vld [vmem:[%s6 + $0x40] sm:$0xf]
        %v1378 = vld [vmem:[%s6 + $0x44] sm:$0xf]
        %v1379 = vld [vmem:[%s6 + $0x48] sm:$0xf]
        %v1380 = vld [vmem:[%s6 + $0x4c] sm:$0xf]
        %v1381 = vld [vmem:[%s6 + $0x50] sm:$0xf]
        %v1382 = vld [vmem:[%s6 + $0x54] sm:$0xf]
        %v1383 = vld [vmem:[%s6 + $0x58] sm:$0xf]
        %v1384 = vld [vmem:[%s6 + $0x5c] sm:$0xf]
        %v1385 = vld [vmem:[%s6 + $0x60] sm:$0xf]
        %v1386 = vld [vmem:[%s6 + $0x64] sm:$0xf]
        %v1387 = vld [vmem:[%s6 + $0x68] sm:$0xf]
        %v1388 = vld [vmem:[%s6 + $0x6c] sm:$0xf]
        %v1389 = vld [vmem:[%s6 + $0x70] sm:$0xf]
        %v1390 = vld [vmem:[%s6 + $0x74] sm:$0xf]
        %v1391 = vld [vmem:[%s6 + $0x78] sm:$0xf]
        %v1392 = vld [vmem:[%s6 + $0x7c] sm:$0xf]
        %v1393 = vunpack.c.l.bf16 %v1361
        %v1394 = vunpack.c.l.bf16 %v1362
        %v1395 = vunpack.c.l.bf16 %v1363
        %v1396 = vunpack.c.l.bf16 %v1364
        %v1397 = vunpack.c.l.bf16 %v1365
        %v1398 = vunpack.c.l.bf16 %v1366
        %v1399 = vunpack.c.l.bf16 %v1367
        %v1400 = vunpack.c.l.bf16 %v1368
        %v1401 = vunpack.c.l.bf16 %v1369
        %v1402 = vunpack.c.l.bf16 %v1370
        %v1403 = vunpack.c.l.bf16 %v1371
        %v1404 = vunpack.c.l.bf16 %v1372
        %v1405 = vunpack.c.l.bf16 %v1373
        %v1406 = vunpack.c.l.bf16 %v1374
        %v1407 = vunpack.c.l.bf16 %v1375
        %v1408 = vunpack.c.l.bf16 %v1376
        %v1409 = vunpack.c.l.bf16 %v1377
        %v1410 = vunpack.c.l.bf16 %v1378
        %v1411 = vunpack.c.l.bf16 %v1379
        %v1412 = vunpack.c.l.bf16 %v1380
        %v1413 = vunpack.c.l.bf16 %v1381
        %v1414 = vunpack.c.l.bf16 %v1382
        %v1415 = vunpack.c.l.bf16 %v1383
        %v1416 = vunpack.c.l.bf16 %v1384
        %v1417 = vunpack.c.l.bf16 %v1385
        %v1418 = vunpack.c.l.bf16 %v1386
        %v1419 = vunpack.c.l.bf16 %v1387
        %v1420 = vunpack.c.l.bf16 %v1388
        %v1421 = vunpack.c.l.bf16 %v1389
        %v1422 = vunpack.c.l.bf16 %v1390
        %v1423 = vunpack.c.l.bf16 %v1391
        %v1424 = vunpack.c.l.bf16 %v1392
        %v1425 = vmul.f32 %v1191, %v1393
        %v1426 = vmul.f32 %v1195, %v1394
        %v1427 = vmul.f32 %v1202, %v1395
        %v1428 = vmul.f32 %v1206, %v1396
        %v1429 = vmul.f32 %v1213, %v1397
        %v1430 = vmul.f32 %v1217, %v1398
        %v1431 = vmul.f32 %v1224, %v1399
        %v1432 = vmul.f32 %v1228, %v1400
        %v1433 = vmul.f32 %v1235, %v1401
        %v1434 = vmul.f32 %v1239, %v1402
        %v1435 = vmul.f32 %v1246, %v1403
        %v1436 = vmul.f32 %v1250, %v1404
        %v1437 = vmul.f32 %v1257, %v1405
        %v1438 = vmul.f32 %v1261, %v1406
        %v1439 = vmul.f32 %v1268, %v1407
        %v1440 = vmul.f32 %v1272, %v1408
        %v1441 = vmul.f32 %v1279, %v1409
        %v1442 = vmul.f32 %v1283, %v1410
        %v1443 = vmul.f32 %v1290, %v1411
        %v1444 = vmul.f32 %v1294, %v1412
        %v1445 = vmul.f32 %v1301, %v1413
        %v1446 = vmul.f32 %v1305, %v1414
        %v1447 = vmul.f32 %v1312, %v1415
        %v1448 = vmul.f32 %v1316, %v1416
        %v1449 = vmul.f32 %v1323, %v1417
        %v1450 = vmul.f32 %v1327, %v1418
        %v1451 = vmul.f32 %v1334, %v1419
        %v1452 = vmul.f32 %v1338, %v1420
        %v1453 = vmul.f32 %v1345, %v1421
        %v1454 = vmul.f32 %v1349, %v1422
        %v1455 = vmul.f32 %v1356, %v1423
        %v1456 = vmul.f32 %v1360, %v1424
        %v1457 = vsel %vm802, %v1425, 0.0
        %v1458 = vsel %vm802, %v1426, 0.0
        %v1459 = vadd.f32 %v1457, %v1458
        %v1460 = vrot.slane %v1459, 4
        %v1461 = vadd.f32 %v1459, %v1460
        %v1462 = vrot.slane %v1461, 2
        %v1463 = vadd.f32 %v1461, %v1462
        %v1464 = vrot.slane %v1463, 1
        %v1465 = vadd.f32 %v1463, %v1464
        %v1466 = vsel %vm802, %v1427, 0.0
        %v1467 = vsel %vm802, %v1428, 0.0
        %v1468 = vadd.f32 %v1466, %v1467
        %v1469 = vrot.slane %v1468, 4
        %v1470 = vadd.f32 %v1468, %v1469
        %v1471 = vrot.slane %v1470, 2
        %v1472 = vadd.f32 %v1470, %v1471
        %v1473 = vrot.slane %v1472, 1
        %v1474 = vadd.f32 %v1472, %v1473
        %v1475 = vsel %vm802, %v1429, 0.0
        %v1476 = vsel %vm802, %v1430, 0.0
        %v1477 = vadd.f32 %v1475, %v1476
        %v1478 = vrot.slane %v1477, 4
        %v1479 = vadd.f32 %v1477, %v1478
        %v1480 = vrot.slane %v1479, 2
        %v1481 = vadd.f32 %v1479, %v1480
        %v1482 = vrot.slane %v1481, 1
        %v1483 = vadd.f32 %v1481, %v1482
        %v1484 = vsel %vm802, %v1431, 0.0
        %v1485 = vsel %vm802, %v1432, 0.0
        %v1486 = vadd.f32 %v1484, %v1485
        %v1487 = vrot.slane %v1486, 4
        %v1488 = vadd.f32 %v1486, %v1487
        %v1489 = vrot.slane %v1488, 2
        %v1490 = vadd.f32 %v1488, %v1489
        %v1491 = vrot.slane %v1490, 1
        %v1492 = vadd.f32 %v1490, %v1491
        %v1493 = vsel %vm802, %v1433, 0.0
        %v1494 = vsel %vm802, %v1434, 0.0
        %v1495 = vadd.f32 %v1493, %v1494
        %v1496 = vrot.slane %v1495, 4
        %v1497 = vadd.f32 %v1495, %v1496
        %v1498 = vrot.slane %v1497, 2
        %v1499 = vadd.f32 %v1497, %v1498
        %v1500 = vrot.slane %v1499, 1
        %v1501 = vadd.f32 %v1499, %v1500
        %v1502 = vsel %vm802, %v1435, 0.0
        %v1503 = vsel %vm802, %v1436, 0.0
        %v1504 = vadd.f32 %v1502, %v1503
        %v1505 = vrot.slane %v1504, 4
        %v1506 = vadd.f32 %v1504, %v1505
        %v1507 = vrot.slane %v1506, 2
        %v1508 = vadd.f32 %v1506, %v1507
        %v1509 = vrot.slane %v1508, 1
        %v1510 = vadd.f32 %v1508, %v1509
        %v1511 = vsel %vm802, %v1437, 0.0
        %v1512 = vsel %vm802, %v1438, 0.0
        %v1513 = vadd.f32 %v1511, %v1512
        %v1514 = vrot.slane %v1513, 4
        %v1515 = vadd.f32 %v1513, %v1514
        %v1516 = vrot.slane %v1515, 2
        %v1517 = vadd.f32 %v1515, %v1516
        %v1518 = vrot.slane %v1517, 1
        %v1519 = vadd.f32 %v1517, %v1518
        %v1520 = vsel %vm802, %v1439, 0.0
        %v1521 = vsel %vm802, %v1440, 0.0
        %v1522 = vadd.f32 %v1520, %v1521
        %v1523 = vrot.slane %v1522, 4
        %v1524 = vadd.f32 %v1522, %v1523
        %v1525 = vrot.slane %v1524, 2
        %v1526 = vadd.f32 %v1524, %v1525
        %v1527 = vrot.slane %v1526, 1
        %v1528 = vadd.f32 %v1526, %v1527
        %v1529 = vsel %vm802, %v1441, 0.0
        %v1530 = vsel %vm802, %v1442, 0.0
        %v1531 = vadd.f32 %v1529, %v1530
        %v1532 = vrot.slane %v1531, 4
        %v1533 = vadd.f32 %v1531, %v1532
        %v1534 = vrot.slane %v1533, 2
        %v1535 = vadd.f32 %v1533, %v1534
        %v1536 = vrot.slane %v1535, 1
        %v1537 = vadd.f32 %v1535, %v1536
        %v1538 = vsel %vm802, %v1443, 0.0
        %v1539 = vsel %vm802, %v1444, 0.0
        %v1540 = vadd.f32 %v1538, %v1539
        %v1541 = vrot.slane %v1540, 4
        %v1542 = vadd.f32 %v1540, %v1541
        %v1543 = vrot.slane %v1542, 2
        %v1544 = vadd.f32 %v1542, %v1543
        %v1545 = vrot.slane %v1544, 1
        %v1546 = vadd.f32 %v1544, %v1545
        %v1547 = vsel %vm802, %v1445, 0.0
        %v1548 = vsel %vm802, %v1446, 0.0
        %v1549 = vadd.f32 %v1547, %v1548
        %v1550 = vrot.slane %v1549, 4
        %v1551 = vadd.f32 %v1549, %v1550
        %v1552 = vrot.slane %v1551, 2
        %v1553 = vadd.f32 %v1551, %v1552
        %v1554 = vrot.slane %v1553, 1
        %v1555 = vadd.f32 %v1553, %v1554
        %v1556 = vsel %vm802, %v1447, 0.0
        %v1557 = vsel %vm802, %v1448, 0.0
        %v1558 = vadd.f32 %v1556, %v1557
        %v1559 = vrot.slane %v1558, 4
        %v1560 = vadd.f32 %v1558, %v1559
        %v1561 = vrot.slane %v1560, 2
        %v1562 = vadd.f32 %v1560, %v1561
        %v1563 = vrot.slane %v1562, 1
        %v1564 = vadd.f32 %v1562, %v1563
        %v1565 = vsel %vm802, %v1449, 0.0
        %v1566 = vsel %vm802, %v1450, 0.0
        %v1567 = vadd.f32 %v1565, %v1566
        %v1568 = vrot.slane %v1567, 4
        %v1569 = vadd.f32 %v1567, %v1568
        %v1570 = vrot.slane %v1569, 2
        %v1571 = vadd.f32 %v1569, %v1570
        %v1572 = vrot.slane %v1571, 1
        %v1573 = vadd.f32 %v1571, %v1572
        %v1574 = vsel %vm802, %v1451, 0.0
        %v1575 = vsel %vm802, %v1452, 0.0
        %v1576 = vadd.f32 %v1574, %v1575
        %v1577 = vrot.slane %v1576, 4
        %v1578 = vadd.f32 %v1576, %v1577
        %v1579 = vrot.slane %v1578, 2
        %v1580 = vadd.f32 %v1578, %v1579
        %v1581 = vrot.slane %v1580, 1
        %v1582 = vadd.f32 %v1580, %v1581
        %v1583 = vsel %vm802, %v1453, 0.0
        %v1584 = vsel %vm802, %v1454, 0.0
        %v1585 = vadd.f32 %v1583, %v1584
        %v1586 = vrot.slane %v1585, 4
        %v1587 = vadd.f32 %v1585, %v1586
        %v1588 = vrot.slane %v1587, 2
        %v1589 = vadd.f32 %v1587, %v1588
        %v1590 = vrot.slane %v1589, 1
        %v1591 = vadd.f32 %v1589, %v1590
        %v1592 = vsel %vm802, %v1455, 0.0
        %v1593 = vsel %vm802, %v1456, 0.0
        %v1594 = vadd.f32 %v1592, %v1593
        %v1595 = vrot.slane %v1594, 4
        %v1596 = vadd.f32 %v1594, %v1595
        %v1597 = vrot.slane %v1596, 2
        %v1598 = vadd.f32 %v1596, %v1597
        %v1599 = vrot.slane %v1598, 1
        %v1600 = vadd.f32 %v1598, %v1599
        %1601 = vrot.lane.b32.xlu0 %v525, 96
        %v1602 = vpop.permute.xlu0 %1601
        %v1620 = vsel %vm1082, %v1474, %v1465
        %v1621 = vsel %vm1084, %v1483, %v1620
        %v1622 = vsel %vm1086, %v1492, %v1621
        %v1623 = vsel %vm1088, %v1501, %v1622
        %v1624 = vsel %vm1090, %v1510, %v1623
        %v1625 = vsel %vm1092, %v1519, %v1624
        %v1626 = vsel %vm1094, %v1528, %v1625
        %v1627 = vsel %vm1082, %v1546, %v1537
        %v1628 = vsel %vm1084, %v1555, %v1627
        %v1629 = vsel %vm1086, %v1564, %v1628
        %v1630 = vsel %vm1088, %v1573, %v1629
        %v1631 = vsel %vm1090, %v1582, %v1630
        %v1632 = vsel %vm1092, %v1591, %v1631
        %v1633 = vsel %vm1094, %v1600, %v1632
        %v1637 = vsel %vm802, %v1184, 0
        %1639 = vmatprep.subr.bf16.mxu0 0
        %1640 = vmatpush1.bf16.msra.mxu0 %v1602
        %1641 = vmatprep.subr.bf16.mxu0 0
        %1642 = vmatpush1.bf16.msra.mxu0 0
        %1643 = vmatprep.subr.bf16.mxu0 0
        %1644 = vmatpush1.bf16.msra.mxu0 0
        %1645 = vmatprep.subr.bf16.mxu0 0
        %1646 = vmatpush1.bf16.msra.mxu0 0
        %1647 = vmatprep.subr.bf16.mxu0 0
        %1648 = vmatpush1.bf16.msra.mxu0 0
        %1649 = vmatprep.subr.bf16.mxu0 0
        %1650 = vmatpush1.bf16.msra.mxu0 0
        %1651 = vmatprep.subr.bf16.mxu0 0
        %1652 = vmatpush1.bf16.msra.mxu0 0
        %1653 = vmatprep.subr.bf16.mxu0 0
        %1654 = vmatpush1.bf16.msra.mxu0 0
        %1655 = vmatprep.subr.bf16.mxu0 0
        %1656 = vmatpush1.bf16.msra.mxu0 0
        %1657 = vmatprep.subr.bf16.mxu0 0
        %1658 = vmatpush1.bf16.msra.mxu0 0
        %1659 = vmatprep.subr.bf16.mxu0 0
        %1660 = vmatpush1.bf16.msra.mxu0 0
        %1661 = vmatprep.subr.bf16.mxu0 0
        %1662 = vmatpush1.bf16.msra.mxu0 0
        %1663 = vmatprep.subr.bf16.mxu0 0
        %1664 = vmatpush1.bf16.msra.mxu0 0
        %1665 = vmatprep.subr.bf16.mxu0 0
        %1666 = vmatpush1.bf16.msra.mxu0 0
        %1667 = vmatprep.subr.bf16.mxu0 0
        %1668 = vmatpush1.bf16.msra.mxu0 0
        %1669 = vmatprep.subr.bf16.mxu0 0
        %1670 = vmatpush1.bf16.msra.mxu0 0
        %1671 = vmatprep.mubr.bf16.mxu0 0
        %1672 = vmatmul.mubr.bf16.gmra.mrb[0].mxu0 %v1637
        %v1673 = vpop.f32.mrb[0].mxu0
        %v1674 = vadd.f32 %v1626, %v1673
        %v1675 = vpop.f32.mrb[0].mxu0
        %v1676 = vpop.f32.mrb[0].mxu0
        %v1677 = vadd.f32 %v1633, %v1676
        %v1678 = vpop.f32.mrb[0].mxu0
        %1679 = vdwg.mxu0
        %v1680 = vrcp.pop %v1180
        %v1681 = vrcp.pop %v1183
        %v1682 = vmul.f32 %v1674, %v1680
        %v1683 = vmul.f32 %v1677, %v1681
        %v1684 = vpack.c.bf16 %v1683, %v1682
        %v1685 = vld [vmem:[%s394] sm:$0xf]
        %v1686 = vld [vmem:[%s394 + $0x4] sm:$0xf]
        %v1689 = vunpack.c.l.b16 %v1685
        %v1690 = vunpack.c.l.b16 %v1686
        %v1691 = vpack.c.b16 %v1690, %v1689
        %v1694 = vsel %vm802, %v1684, 0
        %1696 = vmatprep.subr.bf16.mxu0 0
        %1697 = vmatpush1.bf16.msra.mxu0 %v1691
        %1698 = vmatprep.subr.bf16.mxu0 0
        %1699 = vmatpush1.bf16.msra.mxu0 0
        %1700 = vmatprep.subr.bf16.mxu0 0
        %1701 = vmatpush1.bf16.msra.mxu0 0
        %1702 = vmatprep.subr.bf16.mxu0 0
        %1703 = vmatpush1.bf16.msra.mxu0 0
        %1704 = vmatprep.subr.bf16.mxu0 0
        %1705 = vmatpush1.bf16.msra.mxu0 0
        %1706 = vmatprep.subr.bf16.mxu0 0
        %1707 = vmatpush1.bf16.msra.mxu0 0
        %1708 = vmatprep.subr.bf16.mxu0 0
        %1709 = vmatpush1.bf16.msra.mxu0 0
        %1710 = vmatprep.subr.bf16.mxu0 0
        %1711 = vmatpush1.bf16.msra.mxu0 0
        %1712 = vmatprep.subr.bf16.mxu0 0
        %1713 = vmatpush1.bf16.msra.mxu0 0
        %1714 = vmatprep.subr.bf16.mxu0 0
        %1715 = vmatpush1.bf16.msra.mxu0 0
        %1716 = vmatprep.subr.bf16.mxu0 0
        %1717 = vmatpush1.bf16.msra.mxu0 0
        %1718 = vmatprep.subr.bf16.mxu0 0
        %1719 = vmatpush1.bf16.msra.mxu0 0
        %1720 = vmatprep.subr.bf16.mxu0 0
        %1721 = vmatpush1.bf16.msra.mxu0 0
        %1722 = vmatprep.subr.bf16.mxu0 0
        %1723 = vmatpush1.bf16.msra.mxu0 0
        %1724 = vmatprep.subr.bf16.mxu0 0
        %1725 = vmatpush1.bf16.msra.mxu0 0
        %1726 = vmatprep.subr.bf16.mxu0 0
        %1727 = vmatpush1.bf16.msra.mxu0 0
        %1728 = vmatprep.mubr.bf16.mxu0 0
        %1729 = vmatmul.mubr.bf16.gmra.mrb[0].mxu0 %v1694
        %v1730 = vpop.f32.mrb[0].mxu0
        %v1731 = vadd.f32 0.0, %v1730
        %v1732 = vpop.f32.mrb[0].mxu0
        %v1733 = vpop.f32.mrb[0].mxu0
        %v1734 = vadd.f32 0.0, %v1733
        %v1735 = vpop.f32.mrb[0].mxu0
        %1736 = vdwg.mxu0
        %p1737 = scmp.eq.s32.totalorder %s27, 0
        // Predicated region
        $region53: #{tpu_custom_call.1} parent=51 // pred_check
          %p1738 = pneg %p1737
        $region54: #{tpu_custom_call.1} parent=51 // pred_check_branch
          %1740 = sbr.rel (%p1738) target = $region56
        $region55: #{tpu_custom_call.1} parent=51 // pred_region
          %1741 = vst [vmem:[%s376] sm:$0xff] 0.0
          %1742 = vst [vmem:[%s376 + $0x8] sm:$0xff] 0.0
        $region56: #{tpu_custom_call.1} parent=51 // pred_fallthru
          _
        %v1743 = vld [vmem:[%s376] sm:$0xff]
        %v1744 = vld [vmem:[%s376 + $0x8] sm:$0xff]
        %v1745 = vadd.f32 %v1743, %v1731
        %v1746 = vadd.f32 %v1744, %v1734
        %1747 = vst [vmem:[%s376] sm:$0xff] %v1745
        %1748 = vst [vmem:[%s376 + $0x8] sm:$0xff] %v1746
        %p1749 = scmp.eq.s32.totalorder %s27, 7
        // Predicated region
        $region57: #{tpu_custom_call.1} parent=51 // pred_check
          %p1750 = pneg %p1749
        $region58: #{tpu_custom_call.1} parent=51 // pred_check_branch
          %1752 = sbr.rel (%p1750) target = $region60
        $region59: #{tpu_custom_call.1} parent=51 // pred_region
          %v1753 = vld [vmem:[%s376] sm:$0xff]
          %v1754 = vld [vmem:[%s376 + $0x8] sm:$0xff]
          %v1755 = vld [vmem:[%s4] sm:$0x1]
          %v1757 = vlaneseq
          %v1758 = vshrl.u32 %v1757, 7
          %v1759 = vsub.s32 0, %v1758
          %v1760 = vrot.slane %v1755, %v1759
          %v1762 = vadd.f32 %v1753, %v1760
          %v1763 = vadd.f32 %v1754, %v1760
          %1764 = vst [vmem:[%s376] sm:$0xff] %v1762
          %1765 = vst [vmem:[%s376 + $0x8] sm:$0xff] %v1763
        $region60: #{tpu_custom_call.1} parent=51 // pred_fallthru
          _
        %s1766 = sand.u32 %s237, 1
        %s1767 = scalar_lea.sflag [#allocation3], %s1766
        %s1768 = sand.u32 %s237, 1
        %s1769 = smul.addr %s1768, 16
        %s1770 = scalar_lea.vmem [#allocation2], %s1769
        // Predicated region
        $region61: #{tpu_custom_call.1} parent=51 // pred_check
          %p1771 = pneg %p247
        $region62: #{tpu_custom_call.1} parent=51 // pred_check_branch
          %1773 = sbr.rel (%p1771) target = $region64
        $region63: #{tpu_custom_call.1} parent=51 // pred_region
          %s1775 = ssub.s32 256, 256
          %1776 = vsyncadd %s1767, %s1775
          %s1777 = smul.addr %s26, 2
          %s1778 = smul.addr %s1777, 128
          %s1779 = scalar_lea.hbm %s8, %s1778
          %s1780 = sshll.u32 %s1770, 4
          %s1781 = int_to_ptr.vmem [resolvable:$true] %s1780
          %1786 = dma.vmem_to_hbm [thread:$0]  %s1781, 256, %s1779, %s1767, 128, 128, 8
        $region64: #{tpu_custom_call.1} parent=51 // pred_fallthru
          _
      $region52: #{tpu_custom_call.1} parent=5 // pred_fallthru
        _
      %p1787 = scmp.le.s32.totalorder 2, %s17
      // Predicated region
      $region65: #{tpu_custom_call.1} parent=5 // pred_check
        %p1788 = pneg %p1787
      $region66: #{tpu_custom_call.1} parent=5 // pred_check_branch
        %1790 = sbr.rel (%p1788) target = $region68
      $region67: #{tpu_custom_call.1} parent=5 // pred_region
        %s1791 = ssub.s32 %s17, 2
        // Predicated region
        $region69: #{tpu_custom_call.1} parent=67 // pred_check
          %p1792 = pneg %p253
        $region70: #{tpu_custom_call.1} parent=67 // pred_check_branch
          %1794 = sbr.rel (%p1792) target = $region72
        $region71: #{tpu_custom_call.1} parent=67 // pred_region
          %s1795 = sand.u32 %s238, 1
          %s1796 = scalar_lea.sflag [#allocation3], %s1795
          %s1797 = sand.u32 %s238, 1
          %s1798 = smul.addr %s1797, 16
          %s1799 = scalar_lea.vmem [#allocation2], %s1798
          %1800 = dma.done %s1796, 256
        $region72: #{tpu_custom_call.1} parent=67 // pred_fallthru
          _
      $region68: #{tpu_custom_call.1} parent=5 // pred_fallthru
        _
    $region6: #{tpu_custom_call.1} parent=1 // loop_footer
      %s21 = sadd.s32 1, %s17
    $region7: #{tpu_custom_call.1} parent=1 // loop_footer_branch
      %16 = sbr.rel target = $region3
    $region8: #{tpu_custom_call.1} parent=1 // loop_exit
      _
    %1801 = vsyncpa [#allocation3], 1
    %s1802 = scalar_lea.sflag [#allocation3], 1
    %1803 = vsyncpa %s1802, 1

</llo_original>
